<compile_context>
chip_gen: v5e
topology: v5e:2x2
jax: 0.10.0
libtpu: 0.0.40
codegen_flags: <defaults>
</compile_context>

<pallas_src>
import functools

import jax
import jax.numpy as jnp
from jax.experimental import pallas as pl
from jax.experimental.pallas import tpu as pltpu


def _round_up(x, m):
    return (x + m - 1) // m * m


def _default_epilogue_dtype():
    """bf16 bias/ReLU epilogue on bf16-native VPUs (v6e/v7x); f32 on v5e and
    older generations (their VPU/EUP have no bf16)."""
    try:
        kind = jax.devices()[0].device_kind.lower()
    except Exception:
        return jnp.float32
    if any(g in kind for g in ("v2", "v3", "v4", "v5")):
        return jnp.float32
    return jnp.bfloat16


def actor_kernel(x_ref, w1_ref, b1_ref, w2_ref, b2_ref, w3_ref, b3_ref, o_ref):
    """relu(x@W1+b1) -> relu(.@W2+b2) -> tanh(.@W3+b3).

    MXU inputs are bf16, accumulation is f32 (preferred_element_type).  The
    bias+ReLU epilogue runs in the dtype the hidden biases were stored in
    (bf16 on v6e/v7x to halve live vreg bytes, f32 on v5e).  The final tanh
    epilogue is always f32.
    """
    act_dt = b1_ref.dtype

    # Layer 1
    x = x_ref[...].astype(jnp.bfloat16)
    h1 = jnp.dot(x, w1_ref[...], preferred_element_type=jnp.float32)
    h1 = jnp.maximum(h1.astype(act_dt) + b1_ref[...], 0).astype(jnp.bfloat16)
    # Layer 2
    h2 = jnp.dot(h1, w2_ref[...], preferred_element_type=jnp.float32)
    h2 = jnp.maximum(h2.astype(act_dt) + b2_ref[...], 0).astype(jnp.bfloat16)
    # Layer 3
    h3 = jnp.dot(h2, w3_ref[...], preferred_element_type=jnp.float32)
    o_ref[...] = jnp.tanh(h3 + b3_ref[...]).astype(o_ref.dtype)


def _const_spec(arr, single_buffer):
    # Block index never changes across the batch grid -> weights stay
    # VMEM-resident; single-buffer them (default double buffering would just
    # waste VMEM).
    if single_buffer:
        return pl.BlockSpec(arr.shape, lambda i: (0, 0),
                            pipeline_mode=pl.Buffered(1))
    return pl.BlockSpec(arr.shape, lambda i: (0, 0))


@functools.partial(jax.jit,
                   static_argnames=("bb", "b_pad", "single_buffer_weights"))
def _actor_forward_jit(state, w1, b1, w2, b2, w3, b3, *,
                       bb, b_pad, single_buffer_weights):
    b, state_dim = state.shape
    l1, l2 = w1.shape[1], w2.shape[1]
    action_dim = w3.shape[1]

    state_p = state if b_pad == b else jnp.pad(state, ((0, b_pad - b), (0, 0)))

    cost = pl.CostEstimate(
        flops=2 * b_pad * (state_dim * l1 + l1 * l2 + l2 * action_dim),
        transcendentals=b_pad * action_dim,
        bytes_accessed=int(
            b_pad * state_dim * 4
            + sum(int(p.size) * p.dtype.itemsize
                  for p in (w1, b1, w2, b2, w3, b3))
            + b_pad * action_dim * 4),
    )

    out = pl.pallas_call(
        actor_kernel,
        out_shape=jax.ShapeDtypeStruct((b_pad, action_dim), jnp.float32),
        grid=(b_pad // bb,),
        in_specs=[
            pl.BlockSpec((bb, state_dim), lambda i: (i, 0)),
            _const_spec(w1, single_buffer_weights),
            _const_spec(b1, single_buffer_weights),
            _const_spec(w2, single_buffer_weights),
            _const_spec(b2, single_buffer_weights),
            _const_spec(w3, single_buffer_weights),
            _const_spec(b3, single_buffer_weights),
        ],
        out_specs=pl.BlockSpec((bb, action_dim), lambda i: (i, 0)),
        compiler_params=pltpu.CompilerParams(
            dimension_semantics=("parallel",)),
        cost_estimate=cost,
    )(state_p, w1, b1, w2, b2, w3, b3)

    # Padded rows produce non-zero garbage (bias -> relu -> tanh); the slice
    # must never be dropped.
    return out[:b]


# One grid step up to 512 rows; larger batches tile by 512 (>=2 "parallel"
# steps then also shard across v7x's 2 TensorCores).
_MAX_BLOCK_B = 512


def actor_forward(state, params):
    """state: [B, state_dim] float32.
    params: kernel-ready dict from init_actor_params()."""
    b = state.shape[0]
    bb = min(_MAX_BLOCK_B, _round_up(b, 8))
    b_pad = _round_up(b, bb)
    args = (state, params["w1"], params["b1"], params["w2"], params["b2"],
            params["w3"], params["b3"])
    try:
        return _actor_forward_jit(*args, bb=bb, b_pad=b_pad,
                                  single_buffer_weights=True)
    except Exception:
        # Fallback for jax versions without BlockSpec(pipeline_mode=...).
        return _actor_forward_jit(*args, bb=bb, b_pad=b_pad,
                                  single_buffer_weights=False)


def init_actor_params(key, state_dim, action_dim,
                      layer1_size=400, layer2_size=300, epilogue_dtype=None):
    """PyTorch nn.Linear default init (U(-1/sqrt(fan_in), +1/sqrt(fan_in))),
    stored kernel-ready ONCE here (not per forward call):
      * weights pre-transposed to [in, out] and cast to bf16 (MXU input dtype),
      * hidden-layer biases stored in the epilogue dtype (bf16 on v6e/v7x,
        f32 on v5e), output-layer bias kept f32 (tanh epilogue is f32)."""
    if epilogue_dtype is None:
        epilogue_dtype = _default_epilogue_dtype()

    def linear(k, fan_in, fan_out, bias_dtype):
        kw, kb = jax.random.split(k)
        bound = 1.0 / jnp.sqrt(fan_in)
        w = jax.random.uniform(kw, (fan_out, fan_in), jnp.float32, -bound, bound)
        bvec = jax.random.uniform(kb, (fan_out,), jnp.float32, -bound, bound)
        return w.T.astype(jnp.bfloat16), bvec[None, :].astype(bias_dtype)

    k1, k2, k3 = jax.random.split(key, 3)
    w1, b1 = linear(k1, state_dim, layer1_size, epilogue_dtype)
    w2, b2 = linear(k2, layer1_size, layer2_size, epilogue_dtype)
    w3, b3 = linear(k3, layer2_size, action_dim, jnp.float32)
    return {"w1": w1, "b1": b1, "w2": w2, "b2": b2, "w3": w3, "b3": b3}


def actor_forward_ref(state, params):
    """Pure-JAX reference using the same stored weights/biases in f32 math."""
    w1 = params["w1"].astype(jnp.float32)
    w2 = params["w2"].astype(jnp.float32)
    w3 = params["w3"].astype(jnp.float32)
    h = jnp.maximum(state @ w1 + params["b1"].astype(jnp.float32), 0.0)
    h = jnp.maximum(h @ w2 + params["b2"].astype(jnp.float32), 0.0)
    return jnp.tanh(h @ w3 + params["b3"].astype(jnp.float32))


if __name__ == "__main__":
    key = jax.random.PRNGKey(0)
    kp, kx = jax.random.split(key)

    batch = 2
    state_dim = 8
    action_dim = 4
    layer1_size = 400
    layer2_size = 300

    params = init_actor_params(kp, state_dim, action_dim,
                               layer1_size, layer2_size)
    state = jax.random.normal(kx, (batch, state_dim), jnp.float32)

    out = jax.block_until_ready(actor_forward(state, params))
    ref = actor_forward_ref(state, params)

    assert out.shape == (batch, action_dim)
    # bf16 weights + bf16 intermediate activations -> relaxed tolerance.
    assert jnp.allclose(out, ref, atol=2e-2, rtol=2e-2), "mismatch vs JAX reference"

    print("KERNEL_OK")
</pallas_src>

<mosaic_0001>
module attributes {stable_mosaic.version = 11 : i64} {
  func.func @actor_kernel(%arg0: i32, %arg1: memref<8x8xf32, #tpu.memory_space<vmem>>, %arg2: memref<8x400xbf16, #tpu.memory_space<vmem>>, %arg3: memref<1x400xbf16, #tpu.memory_space<vmem>>, %arg4: memref<400x300xbf16, #tpu.memory_space<vmem>>, %arg5: memref<1x300xbf16, #tpu.memory_space<vmem>>, %arg6: memref<300x4xbf16, #tpu.memory_space<vmem>>, %arg7: memref<1x4xf32, #tpu.memory_space<vmem>>, %arg8: memref<8x4xf32, #tpu.memory_space<vmem>>) attributes {dimension_semantics = [#tpu.dimension_semantics<parallel>], iteration_bounds = array<i64: 1>, scalar_prefetch = 0 : i64, scratch_operands = 0 : i64, tpu.core_type = #tpu.core_type<tc>, window_params = [{transform_indices = @transform_0, window_bounds = array<i64: 8, 8>}, {pipeline_mode = #tpu.pipeline_mode<synchronous>, transform_indices = @transform_1, window_bounds = array<i64: 8, 400>}, {pipeline_mode = #tpu.pipeline_mode<synchronous>, transform_indices = @transform_2, window_bounds = array<i64: 1, 400>}, {pipeline_mode = #tpu.pipeline_mode<synchronous>, transform_indices = @transform_3, window_bounds = array<i64: 400, 300>}, {pipeline_mode = #tpu.pipeline_mode<synchronous>, transform_indices = @transform_4, window_bounds = array<i64: 1, 300>}, {pipeline_mode = #tpu.pipeline_mode<synchronous>, transform_indices = @transform_5, window_bounds = array<i64: 300, 4>}, {pipeline_mode = #tpu.pipeline_mode<synchronous>, transform_indices = @transform_6, window_bounds = array<i64: 1, 4>}, {transform_indices = @transform_7, window_bounds = array<i64: 8, 4>}]} {
    %c0 = arith.constant 0 : index
    %c0_0 = arith.constant 0 : index
    %0 = vector.load %arg1[%c0, %c0_0] : memref<8x8xf32, #tpu.memory_space<vmem>>, vector<8x8xf32>
    %1 = arith.truncf %0 : vector<8x8xf32> to vector<8x8xbf16>
    %c0_1 = arith.constant 0 : index
    %c0_2 = arith.constant 0 : index
    %2 = vector.load %arg2[%c0_1, %c0_2] : memref<8x400xbf16, #tpu.memory_space<vmem>>, vector<8x400xbf16>
    %cst = arith.constant dense<0.000000e+00> : vector<8x400xf32>
    %3 = tpu.matmul %1, %2, %cst {dimension_numbers = #tpu.dot_dimension_numbers<[1], [0], [0], [1], [0, 0, 1, 1], [], []>} : vector<8x8xbf16>, vector<8x400xbf16>, vector<8x400xf32> -> vector<8x400xf32>
    %4 = arith.truncf %3 : vector<8x400xf32> to vector<8x400xbf16>
    %c0_3 = arith.constant 0 : index
    %c0_4 = arith.constant 0 : index
    %5 = vector.load %arg3[%c0_3, %c0_4] : memref<1x400xbf16, #tpu.memory_space<vmem>>, vector<1x400xbf16>
    %6 = vector.broadcast %5 : vector<1x400xbf16> to vector<8x400xbf16>
    %7 = arith.addf %4, %6 : vector<8x400xbf16>
    %cst_5 = arith.constant 0.000000e+00 : bf16
    %8 = vector.broadcast %cst_5 : bf16 to vector<8x400xbf16>
    %9 = arith.maximumf %7, %8 : vector<8x400xbf16>
    %c0_6 = arith.constant 0 : index
    %c0_7 = arith.constant 0 : index
    %10 = vector.load %arg4[%c0_6, %c0_7] : memref<400x300xbf16, #tpu.memory_space<vmem>>, vector<400x300xbf16>
    %cst_8 = arith.constant dense<0.000000e+00> : vector<8x300xf32>
    %11 = tpu.matmul %9, %10, %cst_8 {dimension_numbers = #tpu.dot_dimension_numbers<[1], [0], [0], [1], [0, 0, 1, 1], [], []>} : vector<8x400xbf16>, vector<400x300xbf16>, vector<8x300xf32> -> vector<8x300xf32>
    %12 = arith.truncf %11 : vector<8x300xf32> to vector<8x300xbf16>
    %c0_9 = arith.constant 0 : index
    %c0_10 = arith.constant 0 : index
    %13 = vector.load %arg5[%c0_9, %c0_10] : memref<1x300xbf16, #tpu.memory_space<vmem>>, vector<1x300xbf16>
    %14 = vector.broadcast %13 : vector<1x300xbf16> to vector<8x300xbf16>
    %15 = arith.addf %12, %14 : vector<8x300xbf16>
    %cst_11 = arith.constant 0.000000e+00 : bf16
    %16 = vector.broadcast %cst_11 : bf16 to vector<8x300xbf16>
    %17 = arith.maximumf %15, %16 : vector<8x300xbf16>
    %c0_12 = arith.constant 0 : index
    %c0_13 = arith.constant 0 : index
    %18 = vector.load %arg6[%c0_12, %c0_13] : memref<300x4xbf16, #tpu.memory_space<vmem>>, vector<300x4xbf16>
    %cst_14 = arith.constant dense<0.000000e+00> : vector<8x4xf32>
    %19 = tpu.matmul %17, %18, %cst_14 {dimension_numbers = #tpu.dot_dimension_numbers<[1], [0], [0], [1], [0, 0, 1, 1], [], []>} : vector<8x300xbf16>, vector<300x4xbf16>, vector<8x4xf32> -> vector<8x4xf32>
    %c0_15 = arith.constant 0 : index
    %c0_16 = arith.constant 0 : index
    %20 = vector.load %arg7[%c0_15, %c0_16] : memref<1x4xf32, #tpu.memory_space<vmem>>, vector<1x4xf32>
    %21 = vector.broadcast %20 : vector<1x4xf32> to vector<8x4xf32>
    %22 = arith.addf %19, %21 : vector<8x4xf32>
    %23 = math.tanh %22 : vector<8x4xf32>
    %c0_17 = arith.constant 0 : index
    %c0_18 = arith.constant 0 : index
    %24 = vector.load %arg8[%c0_17, %c0_18] : memref<8x4xf32, #tpu.memory_space<vmem>>, vector<8x4xf32>
    tpu.vector_store %arg8[%c0_17, %c0_18], %23 {strides = array<i32>} : memref<8x4xf32, #tpu.memory_space<vmem>>, vector<8x4xf32>,
    return
  }
  func.func @transform_0(%arg0: i32) -> (i32, i32) {
    %c0_i32 = arith.constant 0 : i32
    %c0_i32_0 = arith.constant 0 : i32
    return %arg0, %c0_i32 : i32, i32
  }
  func.func @transform_1(%arg0: i32) -> (i32, i32) {
    %c0_i32 = arith.constant 0 : i32
    %c0_i32_0 = arith.constant 0 : i32
    %c0_i32_1 = arith.constant 0 : i32
    return %c0_i32, %c0_i32_0 : i32, i32
  }
  func.func @transform_2(%arg0: i32) -> (i32, i32) {
    %c0_i32 = arith.constant 0 : i32
    %c0_i32_0 = arith.constant 0 : i32
    %c0_i32_1 = arith.constant 0 : i32
    return %c0_i32, %c0_i32_0 : i32, i32
  }
  func.func @transform_3(%arg0: i32) -> (i32, i32) {
    %c0_i32 = arith.constant 0 : i32
    %c0_i32_0 = arith.constant 0 : i32
    %c0_i32_1 = arith.constant 0 : i32
    return %c0_i32, %c0_i32_0 : i32, i32
  }
  func.func @transform_4(%arg0: i32) -> (i32, i32) {
    %c0_i32 = arith.constant 0 : i32
    %c0_i32_0 = arith.constant 0 : i32
    %c0_i32_1 = arith.constant 0 : i32
    return %c0_i32, %c0_i32_0 : i32, i32
  }
  func.func @transform_5(%arg0: i32) -> (i32, i32) {
    %c0_i32 = arith.constant 0 : i32
    %c0_i32_0 = arith.constant 0 : i32
    %c0_i32_1 = arith.constant 0 : i32
    return %c0_i32, %c0_i32_0 : i32, i32
  }
  func.func @transform_6(%arg0: i32) -> (i32, i32) {
    %c0_i32 = arith.constant 0 : i32
    %c0_i32_0 = arith.constant 0 : i32
    %c0_i32_1 = arith.constant 0 : i32
    return %c0_i32, %c0_i32_0 : i32, i32
  }
  func.func @transform_7(%arg0: i32) -> (i32, i32) {
    %c0_i32 = arith.constant 0 : i32
    %c0_i32_0 = arith.constant 0 : i32
    return %arg0, %c0_i32 : i32, i32
  }
}

module attributes {stable_mosaic.version = 11 : i64} {
  func.func @actor_kernel(%arg0: i32, %arg1: memref<8x8xf32, #tpu.memory_space<vmem>>, %arg2: memref<8x400xbf16, #tpu.memory_space<vmem>>, %arg3: memref<1x400xbf16, #tpu.memory_space<vmem>>, %arg4: memref<400x300xbf16, #tpu.memory_space<vmem>>, %arg5: memref<1x300xbf16, #tpu.memory_space<vmem>>, %arg6: memref<300x4xbf16, #tpu.memory_space<vmem>>, %arg7: memref<1x4xf32, #tpu.memory_space<vmem>>, %arg8: memref<8x4xf32, #tpu.memory_space<vmem>>) attributes {dimension_semantics = [#tpu.dimension_semantics<parallel>], iteration_bounds = array<i64: 1>, scalar_prefetch = 0 : i64, scratch_operands = 0 : i64, tpu.core_type = #tpu.core_type<tc>, window_params = [{transform_indices = @transform_0, window_bounds = array<i64: 8, 8>}, {pipeline_mode = #tpu.pipeline_mode<synchronous>, transform_indices = @transform_1, window_bounds = array<i64: 8, 400>}, {pipeline_mode = #tpu.pipeline_mode<synchronous>, transform_indices = @transform_2, window_bounds = array<i64: 1, 400>}, {pipeline_mode = #tpu.pipeline_mode<synchronous>, transform_indices = @transform_3, window_bounds = array<i64: 400, 300>}, {pipeline_mode = #tpu.pipeline_mode<synchronous>, transform_indices = @transform_4, window_bounds = array<i64: 1, 300>}, {pipeline_mode = #tpu.pipeline_mode<synchronous>, transform_indices = @transform_5, window_bounds = array<i64: 300, 4>}, {pipeline_mode = #tpu.pipeline_mode<synchronous>, transform_indices = @transform_6, window_bounds = array<i64: 1, 4>}, {transform_indices = @transform_7, window_bounds = array<i64: 8, 4>}]} {
    %c0 = arith.constant 0 : index
    %c0_0 = arith.constant 0 : index
    %0 = vector.load %arg1[%c0, %c0_0] : memref<8x8xf32, #tpu.memory_space<vmem>>, vector<8x8xf32>
    %1 = arith.truncf %0 : vector<8x8xf32> to vector<8x8xbf16>
    %c0_1 = arith.constant 0 : index
    %c0_2 = arith.constant 0 : index
    %2 = vector.load %arg2[%c0_1, %c0_2] : memref<8x400xbf16, #tpu.memory_space<vmem>>, vector<8x400xbf16>
    %cst = arith.constant dense<0.000000e+00> : vector<8x400xf32>
    %3 = tpu.matmul %1, %2, %cst {dimension_numbers = #tpu.dot_dimension_numbers<[1], [0], [0], [1], [0, 0, 1, 1], [], []>} : vector<8x8xbf16>, vector<8x400xbf16>, vector<8x400xf32> -> vector<8x400xf32>
    %4 = arith.truncf %3 : vector<8x400xf32> to vector<8x400xbf16>
    %c0_3 = arith.constant 0 : index
    %c0_4 = arith.constant 0 : index
    %5 = vector.load %arg3[%c0_3, %c0_4] : memref<1x400xbf16, #tpu.memory_space<vmem>>, vector<1x400xbf16>
    %6 = vector.broadcast %5 : vector<1x400xbf16> to vector<8x400xbf16>
    %7 = arith.addf %4, %6 : vector<8x400xbf16>
    %cst_5 = arith.constant 0.000000e+00 : bf16
    %8 = vector.broadcast %cst_5 : bf16 to vector<8x400xbf16>
    %9 = arith.maximumf %7, %8 : vector<8x400xbf16>
    %c0_6 = arith.constant 0 : index
    %c0_7 = arith.constant 0 : index
    %10 = vector.load %arg4[%c0_6, %c0_7] : memref<400x300xbf16, #tpu.memory_space<vmem>>, vector<400x300xbf16>
    %cst_8 = arith.constant dense<0.000000e+00> : vector<8x300xf32>
    %11 = tpu.matmul %9, %10, %cst_8 {dimension_numbers = #tpu.dot_dimension_numbers<[1], [0], [0], [1], [0, 0, 1, 1], [], []>} : vector<8x400xbf16>, vector<400x300xbf16>, vector<8x300xf32> -> vector<8x300xf32>
    %12 = arith.truncf %11 : vector<8x300xf32> to vector<8x300xbf16>
    %c0_9 = arith.constant 0 : index
    %c0_10 = arith.constant 0 : index
    %13 = vector.load %arg5[%c0_9, %c0_10] : memref<1x300xbf16, #tpu.memory_space<vmem>>, vector<1x300xbf16>
    %14 = vector.broadcast %13 : vector<1x300xbf16> to vector<8x300xbf16>
    %15 = arith.addf %12, %14 : vector<8x300xbf16>
    %cst_11 = arith.constant 0.000000e+00 : bf16
    %16 = vector.broadcast %cst_11 : bf16 to vector<8x300xbf16>
    %17 = arith.maximumf %15, %16 : vector<8x300xbf16>
    %c0_12 = arith.constant 0 : index
    %c0_13 = arith.constant 0 : index
    %18 = vector.load %arg6[%c0_12, %c0_13] : memref<300x4xbf16, #tpu.memory_space<vmem>>, vector<300x4xbf16>
    %cst_14 = arith.constant dense<0.000000e+00> : vector<8x4xf32>
    %19 = tpu.matmul %17, %18, %cst_14 {dimension_numbers = #tpu.dot_dimension_numbers<[1], [0], [0], [1], [0, 0, 1, 1], [], []>} : vector<8x300xbf16>, vector<300x4xbf16>, vector<8x4xf32> -> vector<8x4xf32>
    %c0_15 = arith.constant 0 : index
    %c0_16 = arith.constant 0 : index
    %20 = vector.load %arg7[%c0_15, %c0_16] : memref<1x4xf32, #tpu.memory_space<vmem>>, vector<1x4xf32>
    %21 = vector.broadcast %20 : vector<1x4xf32> to vector<8x4xf32>
    %22 = arith.addf %19, %21 : vector<8x4xf32>
    %23 = math.tanh %22 : vector<8x4xf32>
    %c0_17 = arith.constant 0 : index
    %c0_18 = arith.constant 0 : index
    %24 = vector.load %arg8[%c0_17, %c0_18] : memref<8x4xf32, #tpu.memory_space<vmem>>, vector<8x4xf32>
    tpu.vector_store %arg8[%c0_17, %c0_18], %23 {strides = array<i32>} : memref<8x4xf32, #tpu.memory_space<vmem>>, vector<8x4xf32>,
    return
  }
  func.func @transform_0(%arg0: i32) -> (i32, i32) {
    %c0_i32 = arith.constant 0 : i32
    %c0_i32_0 = arith.constant 0 : i32
    return %arg0, %c0_i32 : i32, i32
  }
  func.func @transform_1(%arg0: i32) -> (i32, i32) {
    %c0_i32 = arith.constant 0 : i32
    %c0_i32_0 = arith.constant 0 : i32
    %c0_i32_1 = arith.constant 0 : i32
    return %c0_i32, %c0_i32_0 : i32, i32
  }
  func.func @transform_2(%arg0: i32) -> (i32, i32) {
    %c0_i32 = arith.constant 0 : i32
    %c0_i32_0 = arith.constant 0 : i32
    %c0_i32_1 = arith.constant 0 : i32
    return %c0_i32, %c0_i32_0 : i32, i32
  }
  func.func @transform_3(%arg0: i32) -> (i32, i32) {
    %c0_i32 = arith.constant 0 : i32
    %c0_i32_0 = arith.constant 0 : i32
    %c0_i32_1 = arith.constant 0 : i32
    return %c0_i32, %c0_i32_0 : i32, i32
  }
  func.func @transform_4(%arg0: i32) -> (i32, i32) {
    %c0_i32 = arith.constant 0 : i32
    %c0_i32_0 = arith.constant 0 : i32
    %c0_i32_1 = arith.constant 0 : i32
    return %c0_i32, %c0_i32_0 : i32, i32
  }
  func.func @transform_5(%arg0: i32) -> (i32, i32) {
    %c0_i32 = arith.constant 0 : i32
    %c0_i32_0 = arith.constant 0 : i32
    %c0_i32_1 = arith.constant 0 : i32
    return %c0_i32, %c0_i32_0 : i32, i32
  }
  func.func @transform_6(%arg0: i32) -> (i32, i32) {
    %c0_i32 = arith.constant 0 : i32
    %c0_i32_0 = arith.constant 0 : i32
    %c0_i32_1 = arith.constant 0 : i32
    return %c0_i32, %c0_i32_0 : i32, i32
  }
  func.func @transform_7(%arg0: i32) -> (i32, i32) {
    %c0_i32 = arith.constant 0 : i32
    %c0_i32_0 = arith.constant 0 : i32
    return %arg0, %c0_i32 : i32, i32
  }
}

</mosaic_0001>

<llo_original>
// kernel: _actor_forward_jit.1
$region0: #{_actor_forward_jit.1}
  #allocation0 [shape = 'u32[]', space=smem, size = 0x4, offset = 0x4, fixed_abs, tag = 'smem constant byte address 0x4 - core index']
  #allocation1 [shape = 'u32[72,128]{1,0:T(1,128)}', space=vmem, size = 0x9000, scoped, tag = 'internal scratch']
  %s0 = inlined_call_operand.vmem [shape: f32[8,8], index: 0, kind: input, shape index: {}]
  %s1 = inlined_call_operand.vmem [shape: bf16[8,400], index: 1, kind: input, shape index: {}]
  %s2 = inlined_call_operand.vmem [shape: bf16[1,400], index: 2, kind: input, shape index: {}]
  %s3 = inlined_call_operand.hbm [shape: bf16[400,300], index: 3, kind: input, shape index: {}]
  %s4 = inlined_call_operand.vmem [shape: bf16[1,300], index: 4, kind: input, shape index: {}]
  %s5 = inlined_call_operand.vmem [shape: bf16[300,4], index: 5, kind: input, shape index: {}]
  %s6 = inlined_call_operand.vmem [shape: f32[1,4], index: 6, kind: input, shape index: {}]
  %s7 = inlined_call_operand.vmem [shape: f32[8,4], index: 7, kind: output, shape index: {}]
  %s8 = sld [smem:[#allocation0]]
  $region42: #{_actor_forward_jit.1} parent=0
    _
  %s10 = ssub.s32 1, %s8
  %s11 = scalar_select 0, %s10, %s8
  $region1: #{_actor_forward_jit.1} parent=0
    #allocation2 [shape = 'u8[307200]{0}', space=vmem, size = 0x4b000, scoped, tag = 'input window, operand 3, single buffered']
    #allocation3 [shape = 's32[1]{0}', space=sflag, size = 0x4, scoped, tag = 'scoped memory for _actor_forward_jit.1']
    %12 = vsyncpa [#allocation3], 0
    // Predicated region
    $region2: #{_actor_forward_jit.1} parent=1 // pred_check
      _
    $region3: #{_actor_forward_jit.1} parent=1 // pred_check_branch
      %14 = sbr.rel (0) target = $region5
    $region4: #{_actor_forward_jit.1} parent=1 // pred_region
      _
    $region5: #{_actor_forward_jit.1} parent=1 // pred_fallthru
      _
    // Predicated region
    $region6: #{_actor_forward_jit.1} parent=1 // pred_check
      _
    $region7: #{_actor_forward_jit.1} parent=1 // pred_check_branch
      %16 = sbr.rel (0) target = $region9
    $region8: #{_actor_forward_jit.1} parent=1 // pred_region
      _
    $region9: #{_actor_forward_jit.1} parent=1 // pred_fallthru
      _
    // Predicated region
    $region10: #{_actor_forward_jit.1} parent=1 // pred_check
      _
    $region11: #{_actor_forward_jit.1} parent=1 // pred_check_branch
      %18 = sbr.rel (0) target = $region13
    $region12: #{_actor_forward_jit.1} parent=1 // pred_region
      _
    $region13: #{_actor_forward_jit.1} parent=1 // pred_fallthru
      _
    // Predicated region
    $region14: #{_actor_forward_jit.1} parent=1 // pred_check
      _
    $region15: #{_actor_forward_jit.1} parent=1 // pred_check_branch
      %20 = sbr.rel (0) target = $region17
    $region16: #{_actor_forward_jit.1} parent=1 // pred_region
      %22 = vsyncadd [#allocation3], 0
      %s23 = sshll.u32 %s3, 4
      %s24 = int_to_ptr.hbm [resolvable:$true] %s23
      %s25 = sshll.u32 [#allocation2], 4
      %s26 = int_to_ptr.vmem [resolvable:$true] %s25
      %31 = dma.hbm_to_vmem [thread:$0]  %s24, 9600, %s26, [#allocation3], 192, 192, 12
    $region17: #{_actor_forward_jit.1} parent=1 // pred_fallthru
      _
    // Predicated region
    $region18: #{_actor_forward_jit.1} parent=1 // pred_check
      _
    $region19: #{_actor_forward_jit.1} parent=1 // pred_check_branch
      %33 = sbr.rel (0) target = $region21
    $region20: #{_actor_forward_jit.1} parent=1 // pred_region
      _
    $region21: #{_actor_forward_jit.1} parent=1 // pred_fallthru
      _
    // Predicated region
    $region22: #{_actor_forward_jit.1} parent=1 // pred_check
      _
    $region23: #{_actor_forward_jit.1} parent=1 // pred_check_branch
      %35 = sbr.rel (0) target = $region25
    $region24: #{_actor_forward_jit.1} parent=1 // pred_region
      _
    $region25: #{_actor_forward_jit.1} parent=1 // pred_fallthru
      _
    // Predicated region
    $region26: #{_actor_forward_jit.1} parent=1 // pred_check
      _
    $region27: #{_actor_forward_jit.1} parent=1 // pred_check_branch
      %37 = sbr.rel (0) target = $region29
    $region28: #{_actor_forward_jit.1} parent=1 // pred_region
      _
    $region29: #{_actor_forward_jit.1} parent=1 // pred_fallthru
      _
    // Predicated region
    $region30: #{_actor_forward_jit.1} parent=1 // pred_check
      _
    $region31: #{_actor_forward_jit.1} parent=1 // pred_check_branch
      %39 = sbr.rel (0) target = $region33
    $region32: #{_actor_forward_jit.1} parent=1 // pred_region
      %41 = dma.done [#allocation3], 9600
    $region33: #{_actor_forward_jit.1} parent=1 // pred_fallthru
      _
    %v43 = vld [vmem:[%s0] sm:$0xff]
    %v44 = vpack.c.bf16 %v43, %v43
    %v45 = vld [vmem:[%s1] sm:$0xff]
    %v46 = vld [vmem:[%s1 + $0x8] sm:$0xff]
    %v49 = vunpack.c.l.b16 %v45
    %v50 = vunpack.c.h.b16 %v45
    %v51 = vunpack.c.l.b16 %v46
    %v52 = vunpack.c.h.b16 %v46
    %v53 = vpack.c.b16 %v49, %v49
    %v54 = vpack.c.b16 %v50, %v50
    %v55 = vpack.c.b16 %v51, %v51
    %v56 = vpack.c.b16 %v52, %v52
    %vm57 = vcmask 64512
    %v59 = vsel %vm57, %v44, 0
    %vm61 = vcmask 1043456
    %v63 = vsel %vm61, %v53, 0
    %v66 = vsel %vm61, %v54, 0
    %v69 = vsel %vm61, %v55, 0
    %v72 = vsel %vm61, %v56, 0
    %74 = vmatpush.bf16.msra.mxu0 0
    %75 = vmatpush.bf16.msra.mxu0 0
    %76 = vmatpush.bf16.msra.mxu0 0
    %77 = vmatpush.bf16.msra.mxu0 0
    %78 = vmatpush.bf16.msra.mxu0 0
    %79 = vmatpush.bf16.msra.mxu0 0
    %80 = vmatpush.bf16.msra.mxu0 0
    %81 = vmatpush.bf16.msra.mxu0 %v63
    %82 = vmatmul.bf16.gmra.mxu0 %v59
    %v83 = vpop.f32.mrf.mxu0
    %v84 = vadd.f32 0.0, %v83
    %v85 = vpop.f32.mrf.mxu0
    %86 = vdwg.mxu0
    %87 = vmatpush.bf16.msra.mxu0 0
    %88 = vmatpush.bf16.msra.mxu0 0
    %89 = vmatpush.bf16.msra.mxu0 0
    %90 = vmatpush.bf16.msra.mxu0 0
    %91 = vmatpush.bf16.msra.mxu0 0
    %92 = vmatpush.bf16.msra.mxu0 0
    %93 = vmatpush.bf16.msra.mxu0 0
    %94 = vmatpush.bf16.msra.mxu0 %v66
    %95 = vmatmul.bf16.gmra.mxu0 %v59
    %v96 = vpop.f32.mrf.mxu0
    %v97 = vadd.f32 0.0, %v96
    %v98 = vpop.f32.mrf.mxu0
    %99 = vdwg.mxu0
    %100 = vmatpush.bf16.msra.mxu0 0
    %101 = vmatpush.bf16.msra.mxu0 0
    %102 = vmatpush.bf16.msra.mxu0 0
    %103 = vmatpush.bf16.msra.mxu0 0
    %104 = vmatpush.bf16.msra.mxu0 0
    %105 = vmatpush.bf16.msra.mxu0 0
    %106 = vmatpush.bf16.msra.mxu0 0
    %107 = vmatpush.bf16.msra.mxu0 %v69
    %108 = vmatmul.bf16.gmra.mxu0 %v59
    %v109 = vpop.f32.mrf.mxu0
    %v110 = vadd.f32 0.0, %v109
    %v111 = vpop.f32.mrf.mxu0
    %112 = vdwg.mxu0
    %113 = vmatpush.bf16.msra.mxu0 0
    %114 = vmatpush.bf16.msra.mxu0 0
    %115 = vmatpush.bf16.msra.mxu0 0
    %116 = vmatpush.bf16.msra.mxu0 0
    %117 = vmatpush.bf16.msra.mxu0 0
    %118 = vmatpush.bf16.msra.mxu0 0
    %119 = vmatpush.bf16.msra.mxu0 0
    %120 = vmatpush.bf16.msra.mxu0 %v72
    %121 = vmatmul.bf16.gmra.mxu0 %v59
    %v122 = vpop.f32.mrf.mxu0
    %v123 = vadd.f32 0.0, %v122
    %v124 = vpop.f32.mrf.mxu0
    %125 = vdwg.mxu0
    %v126 = vpack.c.bf16 %v97, %v84
    %v127 = vpack.c.bf16 %v123, %v110
    %v128 = vld [vmem:[%s2] sm:$0xf]
    %130 = vst [vmem:[#allocation1] ss:$9 sm:$0xff] %v128
    %v131 = vld [vmem:[#allocation1] sm:$0xff]
    %v132 = vld [vmem:[#allocation1 + $0x9] sm:$0xff]
    %v133 = vld [vmem:[#allocation1 + $0x12] sm:$0xff]
    %v134 = vld [vmem:[#allocation1 + $0x1b] sm:$0xff]
    %v135 = vpack.i.b16 %v131, %v131
    %v137 = vperm.slane %v135, 0
    %v138 = vpack.i.b16 %v132, %v132
    %v140 = vperm.slane %v138, 0
    %v141 = vpack.i.b16 %v133, %v133
    %v143 = vperm.slane %v141, 0
    %v144 = vpack.i.b16 %v134, %v134
    %v146 = vperm.slane %v144, 0
    %v147 = vunpack.c.l.bf16 %v126
    %v148 = vunpack.c.h.bf16 %v126
    %v149 = vunpack.c.l.bf16 %v127
    %v150 = vunpack.c.h.bf16 %v127
    %v151 = vunpack.c.l.bf16 %v137
    %v152 = vunpack.c.l.bf16 %v140
    %v153 = vunpack.c.l.bf16 %v143
    %v154 = vunpack.c.l.bf16 %v146
    %v155 = vadd.f32 %v147, %v151
    %v156 = vadd.f32 %v148, %v152
    %v157 = vadd.f32 %v149, %v153
    %v158 = vadd.f32 %v150, %v154
    %v159 = vpack.c.bf16 %v156, %v155
    %v160 = vpack.c.bf16 %v158, %v157
    %v161 = vunpack.c.l.bf16 %v159
    %v162 = vunpack.c.h.bf16 %v159
    %v163 = vunpack.c.l.bf16 %v160
    %v164 = vunpack.c.h.bf16 %v160
    %v165 = vmax.f32 %v161, 0.0
    %v166 = vmax.f32 %v162, 0.0
    %v167 = vmax.f32 %v163, 0.0
    %v168 = vmax.f32 %v164, 0.0
    %v169 = vpack.c.bf16 %v165, %v165
    %v170 = vpack.c.bf16 %v166, %v166
    %v171 = vpack.c.bf16 %v167, %v167
    %v172 = vpack.c.bf16 %v168, %v168
    %v173 = vld [vmem:[#allocation2] sm:$0xff]
    %v174 = vld [vmem:[#allocation2 + $0x8] sm:$0xf]
    %v175 = vld [vmem:[#allocation2 + $0xc] sm:$0xff]
    %v176 = vld [vmem:[#allocation2 + $0x14] sm:$0xf]
    %v177 = vld [vmem:[#allocation2 + $0x18] sm:$0xff]
    %v178 = vld [vmem:[#allocation2 + $0x20] sm:$0xf]
    %v179 = vld [vmem:[#allocation2 + $0x24] sm:$0xff]
    %v180 = vld [vmem:[#allocation2 + $0x2c] sm:$0xf]
    %v181 = vld [vmem:[#allocation2 + $0x30] sm:$0xff]
    %v182 = vld [vmem:[#allocation2 + $0x38] sm:$0xf]
    %v183 = vld [vmem:[#allocation2 + $0x3c] sm:$0xff]
    %v184 = vld [vmem:[#allocation2 + $0x44] sm:$0xf]
    %v185 = vld [vmem:[#allocation2 + $0x48] sm:$0xff]
    %v186 = vld [vmem:[#allocation2 + $0x50] sm:$0xf]
    %v187 = vld [vmem:[#allocation2 + $0x54] sm:$0xff]
    %v188 = vld [vmem:[#allocation2 + $0x5c] sm:$0xf]
    %v189 = vld [vmem:[#allocation2 + $0x60] sm:$0xff]
    %v190 = vld [vmem:[#allocation2 + $0x68] sm:$0xf]
    %v191 = vld [vmem:[#allocation2 + $0x6c] sm:$0xff]
    %v192 = vld [vmem:[#allocation2 + $0x74] sm:$0xf]
    %v193 = vld [vmem:[#allocation2 + $0x78] sm:$0xff]
    %v194 = vld [vmem:[#allocation2 + $0x80] sm:$0xf]
    %v195 = vld [vmem:[#allocation2 + $0x84] sm:$0xff]
    %v196 = vld [vmem:[#allocation2 + $0x8c] sm:$0xf]
    %v197 = vld [vmem:[#allocation2 + $0x90] sm:$0xff]
    %v198 = vld [vmem:[#allocation2 + $0x98] sm:$0xf]
    %v199 = vld [vmem:[#allocation2 + $0x9c] sm:$0xff]
    %v200 = vld [vmem:[#allocation2 + $0xa4] sm:$0xf]
    %v201 = vld [vmem:[#allocation2 + $0xa8] sm:$0xff]
    %v202 = vld [vmem:[#allocation2 + $0xb0] sm:$0xf]
    %v203 = vld [vmem:[#allocation2 + $0xb4] sm:$0xff]
    %v204 = vld [vmem:[#allocation2 + $0xbc] sm:$0xf]
    %v205 = vld [vmem:[#allocation2 + $0xc0] sm:$0xff]
    %v206 = vld [vmem:[#allocation2 + $0xc8] sm:$0xf]
    %v207 = vld [vmem:[#allocation2 + $0xcc] sm:$0xff]
    %v208 = vld [vmem:[#allocation2 + $0xd4] sm:$0xf]
    %v209 = vld [vmem:[#allocation2 + $0xd8] sm:$0xff]
    %v210 = vld [vmem:[#allocation2 + $0xe0] sm:$0xf]
    %v211 = vld [vmem:[#allocation2 + $0xe4] sm:$0xff]
    %v212 = vld [vmem:[#allocation2 + $0xec] sm:$0xf]
    %v213 = vld [vmem:[#allocation2 + $0xf0] sm:$0xff]
    %v214 = vld [vmem:[#allocation2 + $0xf8] sm:$0xf]
    %v215 = vld [vmem:[#allocation2 + $0xfc] sm:$0xff]
    %v216 = vld [vmem:[#allocation2 + $0x104] sm:$0xf]
    %v217 = vld [vmem:[#allocation2 + $0x108] sm:$0xff]
    %v218 = vld [vmem:[#allocation2 + $0x110] sm:$0xf]
    %v219 = vld [vmem:[#allocation2 + $0x114] sm:$0xff]
    %v220 = vld [vmem:[#allocation2 + $0x11c] sm:$0xf]
    %v221 = vld [vmem:[#allocation2 + $0x120] sm:$0xff]
    %v222 = vld [vmem:[#allocation2 + $0x128] sm:$0xf]
    %v223 = vld [vmem:[#allocation2 + $0x12c] sm:$0xff]
    %v224 = vld [vmem:[#allocation2 + $0x134] sm:$0xf]
    %v225 = vld [vmem:[#allocation2 + $0x138] sm:$0xff]
    %v226 = vld [vmem:[#allocation2 + $0x140] sm:$0xf]
    %v227 = vld [vmem:[#allocation2 + $0x144] sm:$0xff]
    %v228 = vld [vmem:[#allocation2 + $0x14c] sm:$0xf]
    %v229 = vld [vmem:[#allocation2 + $0x150] sm:$0xff]
    %v230 = vld [vmem:[#allocation2 + $0x158] sm:$0xf]
    %v231 = vld [vmem:[#allocation2 + $0x15c] sm:$0xff]
    %v232 = vld [vmem:[#allocation2 + $0x164] sm:$0xf]
    %v233 = vld [vmem:[#allocation2 + $0x168] sm:$0xff]
    %v234 = vld [vmem:[#allocation2 + $0x170] sm:$0xf]
    %v235 = vld [vmem:[#allocation2 + $0x174] sm:$0xff]
    %v236 = vld [vmem:[#allocation2 + $0x17c] sm:$0xf]
    %v237 = vld [vmem:[#allocation2 + $0x180] sm:$0xff]
    %v238 = vld [vmem:[#allocation2 + $0x188] sm:$0xf]
    %v239 = vld [vmem:[#allocation2 + $0x18c] sm:$0xff]
    %v240 = vld [vmem:[#allocation2 + $0x194] sm:$0xf]
    %v241 = vld [vmem:[#allocation2 + $0x198] sm:$0xff]
    %v242 = vld [vmem:[#allocation2 + $0x1a0] sm:$0xf]
    %v243 = vld [vmem:[#allocation2 + $0x1a4] sm:$0xff]
    %v244 = vld [vmem:[#allocation2 + $0x1ac] sm:$0xf]
    %v245 = vld [vmem:[#allocation2 + $0x1b0] sm:$0xff]
    %v246 = vld [vmem:[#allocation2 + $0x1b8] sm:$0xf]
    %v247 = vld [vmem:[#allocation2 + $0x1bc] sm:$0xff]
    %v248 = vld [vmem:[#allocation2 + $0x1c4] sm:$0xf]
    %v249 = vld [vmem:[#allocation2 + $0x1c8] sm:$0xff]
    %v250 = vld [vmem:[#allocation2 + $0x1d0] sm:$0xf]
    %v251 = vld [vmem:[#allocation2 + $0x1d4] sm:$0xff]
    %v252 = vld [vmem:[#allocation2 + $0x1dc] sm:$0xf]
    %v253 = vld [vmem:[#allocation2 + $0x1e0] sm:$0xff]
    %v254 = vld [vmem:[#allocation2 + $0x1e8] sm:$0xf]
    %v255 = vld [vmem:[#allocation2 + $0x1ec] sm:$0xff]
    %v256 = vld [vmem:[#allocation2 + $0x1f4] sm:$0xf]
    %v257 = vld [vmem:[#allocation2 + $0x1f8] sm:$0xff]
    %v258 = vld [vmem:[#allocation2 + $0x200] sm:$0xf]
    %v259 = vld [vmem:[#allocation2 + $0x204] sm:$0xff]
    %v260 = vld [vmem:[#allocation2 + $0x20c] sm:$0xf]
    %v261 = vld [vmem:[#allocation2 + $0x210] sm:$0xff]
    %v262 = vld [vmem:[#allocation2 + $0x218] sm:$0xf]
    %v263 = vld [vmem:[#allocation2 + $0x21c] sm:$0xff]
    %v264 = vld [vmem:[#allocation2 + $0x224] sm:$0xf]
    %v265 = vld [vmem:[#allocation2 + $0x228] sm:$0xff]
    %v266 = vld [vmem:[#allocation2 + $0x230] sm:$0xf]
    %v267 = vld [vmem:[#allocation2 + $0x234] sm:$0xff]
    %v268 = vld [vmem:[#allocation2 + $0x23c] sm:$0xf]
    %v269 = vld [vmem:[#allocation2 + $0x240] sm:$0xff]
    %v270 = vld [vmem:[#allocation2 + $0x248] sm:$0xf]
    %v271 = vld [vmem:[#allocation2 + $0x24c] sm:$0xff]
    %v272 = vld [vmem:[#allocation2 + $0x254] sm:$0xf]
    %v373 = vunpack.c.l.b16 %v173
    %v374 = vunpack.c.h.b16 %v173
    %v375 = vunpack.c.l.b16 %v174
    %v376 = vunpack.c.l.b16 %v175
    %v377 = vunpack.c.h.b16 %v175
    %v378 = vunpack.c.l.b16 %v176
    %v379 = vunpack.c.l.b16 %v177
    %v380 = vunpack.c.h.b16 %v177
    %v381 = vunpack.c.l.b16 %v178
    %v382 = vunpack.c.l.b16 %v179
    %v383 = vunpack.c.h.b16 %v179
    %v384 = vunpack.c.l.b16 %v180
    %v385 = vunpack.c.l.b16 %v181
    %v386 = vunpack.c.h.b16 %v181
    %v387 = vunpack.c.l.b16 %v182
    %v388 = vunpack.c.l.b16 %v183
    %v389 = vunpack.c.h.b16 %v183
    %v390 = vunpack.c.l.b16 %v184
    %v391 = vunpack.c.l.b16 %v185
    %v392 = vunpack.c.h.b16 %v185
    %v393 = vunpack.c.l.b16 %v186
    %v394 = vunpack.c.l.b16 %v187
    %v395 = vunpack.c.h.b16 %v187
    %v396 = vunpack.c.l.b16 %v188
    %v397 = vunpack.c.l.b16 %v189
    %v398 = vunpack.c.h.b16 %v189
    %v399 = vunpack.c.l.b16 %v190
    %v400 = vunpack.c.l.b16 %v191
    %v401 = vunpack.c.h.b16 %v191
    %v402 = vunpack.c.l.b16 %v192
    %v403 = vunpack.c.l.b16 %v193
    %v404 = vunpack.c.h.b16 %v193
    %v405 = vunpack.c.l.b16 %v194
    %v406 = vunpack.c.l.b16 %v195
    %v407 = vunpack.c.h.b16 %v195
    %v408 = vunpack.c.l.b16 %v196
    %v409 = vunpack.c.l.b16 %v197
    %v410 = vunpack.c.h.b16 %v197
    %v411 = vunpack.c.l.b16 %v198
    %v412 = vunpack.c.l.b16 %v199
    %v413 = vunpack.c.h.b16 %v199
    %v414 = vunpack.c.l.b16 %v200
    %v415 = vunpack.c.l.b16 %v201
    %v416 = vunpack.c.h.b16 %v201
    %v417 = vunpack.c.l.b16 %v202
    %v418 = vunpack.c.l.b16 %v203
    %v419 = vunpack.c.h.b16 %v203
    %v420 = vunpack.c.l.b16 %v204
    %v421 = vunpack.c.l.b16 %v205
    %v422 = vunpack.c.h.b16 %v205
    %v423 = vunpack.c.l.b16 %v206
    %v424 = vunpack.c.l.b16 %v207
    %v425 = vunpack.c.h.b16 %v207
    %v426 = vunpack.c.l.b16 %v208
    %v427 = vunpack.c.l.b16 %v209
    %v428 = vunpack.c.h.b16 %v209
    %v429 = vunpack.c.l.b16 %v210
    %v430 = vunpack.c.l.b16 %v211
    %v431 = vunpack.c.h.b16 %v211
    %v432 = vunpack.c.l.b16 %v212
    %v433 = vunpack.c.l.b16 %v213
    %v434 = vunpack.c.h.b16 %v213
    %v435 = vunpack.c.l.b16 %v214
    %v436 = vunpack.c.l.b16 %v215
    %v437 = vunpack.c.h.b16 %v215
    %v438 = vunpack.c.l.b16 %v216
    %v439 = vunpack.c.l.b16 %v217
    %v440 = vunpack.c.h.b16 %v217
    %v441 = vunpack.c.l.b16 %v218
    %v442 = vunpack.c.l.b16 %v219
    %v443 = vunpack.c.h.b16 %v219
    %v444 = vunpack.c.l.b16 %v220
    %v445 = vunpack.c.l.b16 %v221
    %v446 = vunpack.c.h.b16 %v221
    %v447 = vunpack.c.l.b16 %v222
    %v448 = vunpack.c.l.b16 %v223
    %v449 = vunpack.c.h.b16 %v223
    %v450 = vunpack.c.l.b16 %v224
    %v451 = vunpack.c.l.b16 %v225
    %v452 = vunpack.c.h.b16 %v225
    %v453 = vunpack.c.l.b16 %v226
    %v454 = vunpack.c.l.b16 %v227
    %v455 = vunpack.c.h.b16 %v227
    %v456 = vunpack.c.l.b16 %v228
    %v457 = vunpack.c.l.b16 %v229
    %v458 = vunpack.c.h.b16 %v229
    %v459 = vunpack.c.l.b16 %v230
    %v460 = vunpack.c.l.b16 %v231
    %v461 = vunpack.c.h.b16 %v231
    %v462 = vunpack.c.l.b16 %v232
    %v463 = vunpack.c.l.b16 %v233
    %v464 = vunpack.c.h.b16 %v233
    %v465 = vunpack.c.l.b16 %v234
    %v466 = vunpack.c.l.b16 %v235
    %v467 = vunpack.c.h.b16 %v235
    %v468 = vunpack.c.l.b16 %v236
    %v469 = vunpack.c.l.b16 %v237
    %v470 = vunpack.c.h.b16 %v237
    %v471 = vunpack.c.l.b16 %v238
    %v472 = vunpack.c.l.b16 %v239
    %v473 = vunpack.c.h.b16 %v239
    %v474 = vunpack.c.l.b16 %v240
    %v475 = vunpack.c.l.b16 %v241
    %v476 = vunpack.c.h.b16 %v241
    %v477 = vunpack.c.l.b16 %v242
    %v478 = vunpack.c.l.b16 %v243
    %v479 = vunpack.c.h.b16 %v243
    %v480 = vunpack.c.l.b16 %v244
    %v481 = vunpack.c.l.b16 %v245
    %v482 = vunpack.c.h.b16 %v245
    %v483 = vunpack.c.l.b16 %v246
    %v484 = vunpack.c.l.b16 %v247
    %v485 = vunpack.c.h.b16 %v247
    %v486 = vunpack.c.l.b16 %v248
    %v487 = vunpack.c.l.b16 %v249
    %v488 = vunpack.c.h.b16 %v249
    %v489 = vunpack.c.l.b16 %v250
    %v490 = vunpack.c.l.b16 %v251
    %v491 = vunpack.c.h.b16 %v251
    %v492 = vunpack.c.l.b16 %v252
    %v493 = vunpack.c.l.b16 %v253
    %v494 = vunpack.c.h.b16 %v253
    %v495 = vunpack.c.l.b16 %v254
    %v496 = vunpack.c.l.b16 %v255
    %v497 = vunpack.c.h.b16 %v255
    %v498 = vunpack.c.l.b16 %v256
    %v499 = vunpack.c.l.b16 %v257
    %v500 = vunpack.c.h.b16 %v257
    %v501 = vunpack.c.l.b16 %v258
    %v502 = vunpack.c.l.b16 %v259
    %v503 = vunpack.c.h.b16 %v259
    %v504 = vunpack.c.l.b16 %v260
    %v505 = vunpack.c.l.b16 %v261
    %v506 = vunpack.c.h.b16 %v261
    %v507 = vunpack.c.l.b16 %v262
    %v508 = vunpack.c.l.b16 %v263
    %v509 = vunpack.c.h.b16 %v263
    %v510 = vunpack.c.l.b16 %v264
    %v511 = vunpack.c.l.b16 %v265
    %v512 = vunpack.c.h.b16 %v265
    %v513 = vunpack.c.l.b16 %v266
    %v514 = vunpack.c.l.b16 %v267
    %v515 = vunpack.c.h.b16 %v267
    %v516 = vunpack.c.l.b16 %v268
    %v517 = vunpack.c.l.b16 %v269
    %v518 = vunpack.c.h.b16 %v269
    %v519 = vunpack.c.l.b16 %v270
    %v520 = vunpack.c.l.b16 %v271
    %v521 = vunpack.c.h.b16 %v271
    %v522 = vunpack.c.l.b16 %v272
    %v523 = vpack.c.b16 %v376, %v373
    %v524 = vpack.c.b16 %v377, %v374
    %v525 = vpack.c.b16 %v378, %v375
    %v526 = vpack.c.b16 %v382, %v379
    %v527 = vpack.c.b16 %v383, %v380
    %v528 = vpack.c.b16 %v384, %v381
    %v529 = vpack.c.b16 %v388, %v385
    %v530 = vpack.c.b16 %v389, %v386
    %v531 = vpack.c.b16 %v390, %v387
    %v532 = vpack.c.b16 %v394, %v391
    %v533 = vpack.c.b16 %v395, %v392
    %v534 = vpack.c.b16 %v396, %v393
    %v535 = vpack.c.b16 %v400, %v397
    %v536 = vpack.c.b16 %v401, %v398
    %v537 = vpack.c.b16 %v402, %v399
    %v538 = vpack.c.b16 %v406, %v403
    %v539 = vpack.c.b16 %v407, %v404
    %v540 = vpack.c.b16 %v408, %v405
    %v541 = vpack.c.b16 %v412, %v409
    %v542 = vpack.c.b16 %v413, %v410
    %v543 = vpack.c.b16 %v414, %v411
    %v544 = vpack.c.b16 %v418, %v415
    %v545 = vpack.c.b16 %v419, %v416
    %v546 = vpack.c.b16 %v420, %v417
    %v547 = vpack.c.b16 %v424, %v421
    %v548 = vpack.c.b16 %v425, %v422
    %v549 = vpack.c.b16 %v426, %v423
    %v550 = vpack.c.b16 %v430, %v427
    %v551 = vpack.c.b16 %v431, %v428
    %v552 = vpack.c.b16 %v432, %v429
    %v553 = vpack.c.b16 %v436, %v433
    %v554 = vpack.c.b16 %v437, %v434
    %v555 = vpack.c.b16 %v438, %v435
    %v556 = vpack.c.b16 %v442, %v439
    %v557 = vpack.c.b16 %v443, %v440
    %v558 = vpack.c.b16 %v444, %v441
    %v559 = vpack.c.b16 %v448, %v445
    %v560 = vpack.c.b16 %v449, %v446
    %v561 = vpack.c.b16 %v450, %v447
    %v562 = vpack.c.b16 %v454, %v451
    %v563 = vpack.c.b16 %v455, %v452
    %v564 = vpack.c.b16 %v456, %v453
    %v565 = vpack.c.b16 %v460, %v457
    %v566 = vpack.c.b16 %v461, %v458
    %v567 = vpack.c.b16 %v462, %v459
    %v568 = vpack.c.b16 %v466, %v463
    %v569 = vpack.c.b16 %v467, %v464
    %v570 = vpack.c.b16 %v468, %v465
    %v571 = vpack.c.b16 %v472, %v469
    %v572 = vpack.c.b16 %v473, %v470
    %v573 = vpack.c.b16 %v474, %v471
    %v574 = vpack.c.b16 %v478, %v475
    %v575 = vpack.c.b16 %v479, %v476
    %v576 = vpack.c.b16 %v480, %v477
    %v577 = vpack.c.b16 %v484, %v481
    %v578 = vpack.c.b16 %v485, %v482
    %v579 = vpack.c.b16 %v486, %v483
    %v580 = vpack.c.b16 %v490, %v487
    %v581 = vpack.c.b16 %v491, %v488
    %v582 = vpack.c.b16 %v492, %v489
    %v583 = vpack.c.b16 %v496, %v493
    %v584 = vpack.c.b16 %v497, %v494
    %v585 = vpack.c.b16 %v498, %v495
    %v586 = vpack.c.b16 %v502, %v499
    %v587 = vpack.c.b16 %v503, %v500
    %v588 = vpack.c.b16 %v504, %v501
    %v589 = vpack.c.b16 %v508, %v505
    %v590 = vpack.c.b16 %v509, %v506
    %v591 = vpack.c.b16 %v510, %v507
    %v592 = vpack.c.b16 %v514, %v511
    %v593 = vpack.c.b16 %v515, %v512
    %v594 = vpack.c.b16 %v516, %v513
    %v595 = vpack.c.b16 %v520, %v517
    %v596 = vpack.c.b16 %v521, %v518
    %v597 = vpack.c.b16 %v522, %v519
    %vm673 = vcmask 130048
    %v675 = vsel %vm673, %v172, 0
    %677 = vmatpush.bf16.msra.mxu0 %v544
    %678 = vmatpush.bf16.msra.mxu0 %v541
    %679 = vmatpush.bf16.msra.mxu0 %v538
    %680 = vmatpush.bf16.msra.mxu0 %v535
    %681 = vmatpush.bf16.msra.mxu0 %v532
    %682 = vmatpush.bf16.msra.mxu0 %v529
    %683 = vmatpush.bf16.msra.mxu0 %v526
    %684 = vmatpush.bf16.msra.mxu0 %v523
    %685 = vmatmul.bf16.gmra.mxu0 %v169
    %v686 = vpop.f32.mrf.mxu0
    %v687 = vadd.f32 0.0, %v686
    %v688 = vpop.f32.mrf.mxu0
    %689 = vdwg.mxu0
    %690 = vmatpush.bf16.msra.mxu0 %v568
    %691 = vmatpush.bf16.msra.mxu0 %v565
    %692 = vmatpush.bf16.msra.mxu0 %v562
    %693 = vmatpush.bf16.msra.mxu0 %v559
    %694 = vmatpush.bf16.msra.mxu0 %v556
    %695 = vmatpush.bf16.msra.mxu0 %v553
    %696 = vmatpush.bf16.msra.mxu0 %v550
    %697 = vmatpush.bf16.msra.mxu0 %v547
    %698 = vmatmul.bf16.gmra.mxu0 %v170
    %v699 = vpop.f32.mrf.mxu0
    %v700 = vadd.f32 %v687, %v699
    %v701 = vpop.f32.mrf.mxu0
    %702 = vdwg.mxu0
    %703 = vmatpush.bf16.msra.mxu0 %v592
    %704 = vmatpush.bf16.msra.mxu0 %v589
    %705 = vmatpush.bf16.msra.mxu0 %v586
    %706 = vmatpush.bf16.msra.mxu0 %v583
    %707 = vmatpush.bf16.msra.mxu0 %v580
    %708 = vmatpush.bf16.msra.mxu0 %v577
    %709 = vmatpush.bf16.msra.mxu0 %v574
    %710 = vmatpush.bf16.msra.mxu0 %v571
    %711 = vmatmul.bf16.gmra.mxu0 %v171
    %v712 = vpop.f32.mrf.mxu0
    %v713 = vadd.f32 %v700, %v712
    %v714 = vpop.f32.mrf.mxu0
    %715 = vdwg.mxu0
    %716 = vmatpush.bf16.msra.mxu0 0
    %717 = vmatpush.bf16.msra.mxu0 0
    %718 = vmatpush.bf16.msra.mxu0 0
    %719 = vmatpush.bf16.msra.mxu0 0
    %720 = vmatpush.bf16.msra.mxu0 0
    %721 = vmatpush.bf16.msra.mxu0 0
    %722 = vmatpush.bf16.msra.mxu0 0
    %723 = vmatpush.bf16.msra.mxu0 %v595
    %724 = vmatmul.bf16.gmra.mxu0 %v675
    %v725 = vpop.f32.mrf.mxu0
    %v726 = vadd.f32 %v713, %v725
    %v727 = vpop.f32.mrf.mxu0
    %728 = vdwg.mxu0
    %729 = vmatpush.bf16.msra.mxu0 %v545
    %730 = vmatpush.bf16.msra.mxu0 %v542
    %731 = vmatpush.bf16.msra.mxu0 %v539
    %732 = vmatpush.bf16.msra.mxu0 %v536
    %733 = vmatpush.bf16.msra.mxu0 %v533
    %734 = vmatpush.bf16.msra.mxu0 %v530
    %735 = vmatpush.bf16.msra.mxu0 %v527
    %736 = vmatpush.bf16.msra.mxu0 %v524
    %737 = vmatmul.bf16.gmra.mxu0 %v169
    %v738 = vpop.f32.mrf.mxu0
    %v739 = vadd.f32 0.0, %v738
    %v740 = vpop.f32.mrf.mxu0
    %741 = vdwg.mxu0
    %742 = vmatpush.bf16.msra.mxu0 %v569
    %743 = vmatpush.bf16.msra.mxu0 %v566
    %744 = vmatpush.bf16.msra.mxu0 %v563
    %745 = vmatpush.bf16.msra.mxu0 %v560
    %746 = vmatpush.bf16.msra.mxu0 %v557
    %747 = vmatpush.bf16.msra.mxu0 %v554
    %748 = vmatpush.bf16.msra.mxu0 %v551
    %749 = vmatpush.bf16.msra.mxu0 %v548
    %750 = vmatmul.bf16.gmra.mxu0 %v170
    %v751 = vpop.f32.mrf.mxu0
    %v752 = vadd.f32 %v739, %v751
    %v753 = vpop.f32.mrf.mxu0
    %754 = vdwg.mxu0
    %755 = vmatpush.bf16.msra.mxu0 %v593
    %756 = vmatpush.bf16.msra.mxu0 %v590
    %757 = vmatpush.bf16.msra.mxu0 %v587
    %758 = vmatpush.bf16.msra.mxu0 %v584
    %759 = vmatpush.bf16.msra.mxu0 %v581
    %760 = vmatpush.bf16.msra.mxu0 %v578
    %761 = vmatpush.bf16.msra.mxu0 %v575
    %762 = vmatpush.bf16.msra.mxu0 %v572
    %763 = vmatmul.bf16.gmra.mxu0 %v171
    %v764 = vpop.f32.mrf.mxu0
    %v765 = vadd.f32 %v752, %v764
    %v766 = vpop.f32.mrf.mxu0
    %767 = vdwg.mxu0
    %768 = vmatpush.bf16.msra.mxu0 0
    %769 = vmatpush.bf16.msra.mxu0 0
    %770 = vmatpush.bf16.msra.mxu0 0
    %771 = vmatpush.bf16.msra.mxu0 0
    %772 = vmatpush.bf16.msra.mxu0 0
    %773 = vmatpush.bf16.msra.mxu0 0
    %774 = vmatpush.bf16.msra.mxu0 0
    %775 = vmatpush.bf16.msra.mxu0 %v596
    %776 = vmatmul.bf16.gmra.mxu0 %v675
    %v777 = vpop.f32.mrf.mxu0
    %v778 = vadd.f32 %v765, %v777
    %v779 = vpop.f32.mrf.mxu0
    %780 = vdwg.mxu0
    %781 = vmatpush.bf16.msra.mxu0 %v546
    %782 = vmatpush.bf16.msra.mxu0 %v543
    %783 = vmatpush.bf16.msra.mxu0 %v540
    %784 = vmatpush.bf16.msra.mxu0 %v537
    %785 = vmatpush.bf16.msra.mxu0 %v534
    %786 = vmatpush.bf16.msra.mxu0 %v531
    %787 = vmatpush.bf16.msra.mxu0 %v528
    %788 = vmatpush.bf16.msra.mxu0 %v525
    %789 = vmatmul.bf16.gmra.mxu0 %v169
    %v790 = vpop.f32.mrf.mxu0
    %v791 = vadd.f32 0.0, %v790
    %v792 = vpop.f32.mrf.mxu0
    %793 = vdwg.mxu0
    %794 = vmatpush.bf16.msra.mxu0 %v570
    %795 = vmatpush.bf16.msra.mxu0 %v567
    %796 = vmatpush.bf16.msra.mxu0 %v564
    %797 = vmatpush.bf16.msra.mxu0 %v561
    %798 = vmatpush.bf16.msra.mxu0 %v558
    %799 = vmatpush.bf16.msra.mxu0 %v555
    %800 = vmatpush.bf16.msra.mxu0 %v552
    %801 = vmatpush.bf16.msra.mxu0 %v549
    %802 = vmatmul.bf16.gmra.mxu0 %v170
    %v803 = vpop.f32.mrf.mxu0
    %v804 = vadd.f32 %v791, %v803
    %v805 = vpop.f32.mrf.mxu0
    %806 = vdwg.mxu0
    %807 = vmatpush.bf16.msra.mxu0 %v594
    %808 = vmatpush.bf16.msra.mxu0 %v591
    %809 = vmatpush.bf16.msra.mxu0 %v588
    %810 = vmatpush.bf16.msra.mxu0 %v585
    %811 = vmatpush.bf16.msra.mxu0 %v582
    %812 = vmatpush.bf16.msra.mxu0 %v579
    %813 = vmatpush.bf16.msra.mxu0 %v576
    %814 = vmatpush.bf16.msra.mxu0 %v573
    %815 = vmatmul.bf16.gmra.mxu0 %v171
    %v816 = vpop.f32.mrf.mxu0
    %v817 = vadd.f32 %v804, %v816
    %v818 = vpop.f32.mrf.mxu0
    %819 = vdwg.mxu0
    %820 = vmatpush.bf16.msra.mxu0 0
    %821 = vmatpush.bf16.msra.mxu0 0
    %822 = vmatpush.bf16.msra.mxu0 0
    %823 = vmatpush.bf16.msra.mxu0 0
    %824 = vmatpush.bf16.msra.mxu0 0
    %825 = vmatpush.bf16.msra.mxu0 0
    %826 = vmatpush.bf16.msra.mxu0 0
    %827 = vmatpush.bf16.msra.mxu0 %v597
    %828 = vmatmul.bf16.gmra.mxu0 %v675
    %v829 = vpop.f32.mrf.mxu0
    %v830 = vadd.f32 %v817, %v829
    %v831 = vpop.f32.mrf.mxu0
    %832 = vdwg.mxu0
    %v833 = vpack.c.bf16 %v778, %v726
    %v834 = vpack.c.bf16 %v830, %v830
    %v835 = vld [vmem:[%s4] sm:$0x7]
    %837 = vst [vmem:[#allocation1] ss:$9 sm:$0xff] %v835
    %v838 = vld [vmem:[#allocation1] sm:$0xff]
    %v839 = vld [vmem:[#allocation1 + $0x9] sm:$0xff]
    %v840 = vld [vmem:[#allocation1 + $0x12] sm:$0xff]
    %v841 = vpack.i.b16 %v838, %v838
    %v843 = vperm.slane %v841, 0
    %v844 = vpack.i.b16 %v839, %v839
    %v846 = vperm.slane %v844, 0
    %v847 = vpack.i.b16 %v840, %v840
    %v849 = vperm.slane %v847, 0
    %v850 = vunpack.c.l.bf16 %v833
    %v851 = vunpack.c.h.bf16 %v833
    %v852 = vunpack.c.l.bf16 %v834
    %v853 = vunpack.c.l.bf16 %v843
    %v854 = vunpack.c.l.bf16 %v846
    %v855 = vunpack.c.l.bf16 %v849
    %v856 = vadd.f32 %v850, %v853
    %v857 = vadd.f32 %v851, %v854
    %v858 = vadd.f32 %v852, %v855
    %v859 = vpack.c.bf16 %v857, %v856
    %v860 = vpack.c.bf16 %v858, %v858
    %v861 = vunpack.c.l.bf16 %v859
    %v862 = vunpack.c.h.bf16 %v859
    %v863 = vunpack.c.l.bf16 %v860
    %v864 = vmax.f32 %v861, 0.0
    %v865 = vmax.f32 %v862, 0.0
    %v866 = vmax.f32 %v863, 0.0
    %v867 = vpack.c.bf16 %v864, %v864
    %v868 = vpack.c.bf16 %v865, %v865
    %v869 = vpack.c.bf16 %v866, %v866
    %v870 = vld [vmem:[%s5] sm:$0xf]
    %v871 = vld [vmem:[%s5 + $0x4] sm:$0xf]
    %v872 = vld [vmem:[%s5 + $0x8] sm:$0xf]
    %v873 = vld [vmem:[%s5 + $0xc] sm:$0xf]
    %v874 = vld [vmem:[%s5 + $0x10] sm:$0xf]
    %v875 = vld [vmem:[%s5 + $0x14] sm:$0xf]
    %v876 = vld [vmem:[%s5 + $0x18] sm:$0xf]
    %v877 = vld [vmem:[%s5 + $0x1c] sm:$0xf]
    %v878 = vld [vmem:[%s5 + $0x20] sm:$0xf]
    %v879 = vld [vmem:[%s5 + $0x24] sm:$0xf]
    %v880 = vld [vmem:[%s5 + $0x28] sm:$0xf]
    %v881 = vld [vmem:[%s5 + $0x2c] sm:$0xf]
    %v882 = vld [vmem:[%s5 + $0x30] sm:$0xf]
    %v883 = vld [vmem:[%s5 + $0x34] sm:$0xf]
    %v884 = vld [vmem:[%s5 + $0x38] sm:$0xf]
    %v885 = vld [vmem:[%s5 + $0x3c] sm:$0xf]
    %v886 = vld [vmem:[%s5 + $0x40] sm:$0xf]
    %v887 = vld [vmem:[%s5 + $0x44] sm:$0xf]
    %v888 = vld [vmem:[%s5 + $0x48] sm:$0xf]
    %v889 = vld [vmem:[%s5 + $0x4c] sm:$0xf]
    %v890 = vld [vmem:[%s5 + $0x50] sm:$0xf]
    %v891 = vld [vmem:[%s5 + $0x54] sm:$0xf]
    %v892 = vld [vmem:[%s5 + $0x58] sm:$0xf]
    %v893 = vld [vmem:[%s5 + $0x5c] sm:$0xf]
    %v894 = vld [vmem:[%s5 + $0x60] sm:$0xf]
    %v895 = vld [vmem:[%s5 + $0x64] sm:$0xf]
    %v896 = vld [vmem:[%s5 + $0x68] sm:$0xf]
    %v897 = vld [vmem:[%s5 + $0x6c] sm:$0xf]
    %v898 = vld [vmem:[%s5 + $0x70] sm:$0xf]
    %v899 = vld [vmem:[%s5 + $0x74] sm:$0xf]
    %v900 = vld [vmem:[%s5 + $0x78] sm:$0xf]
    %v901 = vld [vmem:[%s5 + $0x7c] sm:$0xf]
    %v902 = vld [vmem:[%s5 + $0x80] sm:$0xf]
    %v903 = vld [vmem:[%s5 + $0x84] sm:$0xf]
    %v904 = vld [vmem:[%s5 + $0x88] sm:$0xf]
    %v905 = vld [vmem:[%s5 + $0x8c] sm:$0xf]
    %v906 = vld [vmem:[%s5 + $0x90] sm:$0xf]
    %v907 = vld [vmem:[%s5 + $0x94] sm:$0x3]
    %v908 = vld [vmem:[%s6] sm:$0x1]
    %v910 = vperm.slane %v908, 0
    %v950 = vunpack.c.l.b16 %v870
    %v951 = vunpack.c.l.b16 %v871
    %v952 = vunpack.c.l.b16 %v872
    %v953 = vunpack.c.l.b16 %v873
    %v954 = vunpack.c.l.b16 %v874
    %v955 = vunpack.c.l.b16 %v875
    %v956 = vunpack.c.l.b16 %v876
    %v957 = vunpack.c.l.b16 %v877
    %v958 = vunpack.c.l.b16 %v878
    %v959 = vunpack.c.l.b16 %v879
    %v960 = vunpack.c.l.b16 %v880
    %v961 = vunpack.c.l.b16 %v881
    %v962 = vunpack.c.l.b16 %v882
    %v963 = vunpack.c.l.b16 %v883
    %v964 = vunpack.c.l.b16 %v884
    %v965 = vunpack.c.l.b16 %v885
    %v966 = vunpack.c.l.b16 %v886
    %v967 = vunpack.c.l.b16 %v887
    %v968 = vunpack.c.l.b16 %v888
    %v969 = vunpack.c.l.b16 %v889
    %v970 = vunpack.c.l.b16 %v890
    %v971 = vunpack.c.l.b16 %v891
    %v972 = vunpack.c.l.b16 %v892
    %v973 = vunpack.c.l.b16 %v893
    %v974 = vunpack.c.l.b16 %v894
    %v975 = vunpack.c.l.b16 %v895
    %v976 = vunpack.c.l.b16 %v896
    %v977 = vunpack.c.l.b16 %v897
    %v978 = vunpack.c.l.b16 %v898
    %v979 = vunpack.c.l.b16 %v899
    %v980 = vunpack.c.l.b16 %v900
    %v981 = vunpack.c.l.b16 %v901
    %v982 = vunpack.c.l.b16 %v902
    %v983 = vunpack.c.l.b16 %v903
    %v984 = vunpack.c.l.b16 %v904
    %v985 = vunpack.c.l.b16 %v905
    %v986 = vunpack.c.l.b16 %v906
    %v987 = vunpack.c.l.b16 %v907
    %v988 = vpack.c.b16 %v951, %v950
    %v989 = vpack.c.b16 %v953, %v952
    %v990 = vpack.c.b16 %v955, %v954
    %v991 = vpack.c.b16 %v957, %v956
    %v992 = vpack.c.b16 %v959, %v958
    %v993 = vpack.c.b16 %v961, %v960
    %v994 = vpack.c.b16 %v963, %v962
    %v995 = vpack.c.b16 %v965, %v964
    %v996 = vpack.c.b16 %v967, %v966
    %v997 = vpack.c.b16 %v969, %v968
    %v998 = vpack.c.b16 %v971, %v970
    %v999 = vpack.c.b16 %v973, %v972
    %v1000 = vpack.c.b16 %v975, %v974
    %v1001 = vpack.c.b16 %v977, %v976
    %v1002 = vpack.c.b16 %v979, %v978
    %v1003 = vpack.c.b16 %v981, %v980
    %v1004 = vpack.c.b16 %v983, %v982
    %v1005 = vpack.c.b16 %v985, %v984
    %v1006 = vpack.c.b16 %v987, %v986
    %vm1025 = vcmask 359424
    %v1027 = vsel %vm1025, %v869, 0
    %vm1029 = vcmask 1045504
    %v1031 = vsel %vm1029, %v1006, 0
    %1033 = vmatpush.bf16.msra.mxu0 %v995
    %1034 = vmatpush.bf16.msra.mxu0 %v994
    %1035 = vmatpush.bf16.msra.mxu0 %v993
    %1036 = vmatpush.bf16.msra.mxu0 %v992
    %1037 = vmatpush.bf16.msra.mxu0 %v991
    %1038 = vmatpush.bf16.msra.mxu0 %v990
    %1039 = vmatpush.bf16.msra.mxu0 %v989
    %1040 = vmatpush.bf16.msra.mxu0 %v988
    %1041 = vmatmul.bf16.gmra.mxu0 %v867
    %v1042 = vpop.f32.mrf.mxu0
    %v1043 = vadd.f32 %v910, %v1042
    %v1044 = vpop.f32.mrf.mxu0
    %1045 = vdwg.mxu0
    %1046 = vmatpush.bf16.msra.mxu0 %v1003
    %1047 = vmatpush.bf16.msra.mxu0 %v1002
    %1048 = vmatpush.bf16.msra.mxu0 %v1001
    %1049 = vmatpush.bf16.msra.mxu0 %v1000
    %1050 = vmatpush.bf16.msra.mxu0 %v999
    %1051 = vmatpush.bf16.msra.mxu0 %v998
    %1052 = vmatpush.bf16.msra.mxu0 %v997
    %1053 = vmatpush.bf16.msra.mxu0 %v996
    %1054 = vmatmul.bf16.gmra.mxu0 %v868
    %v1055 = vpop.f32.mrf.mxu0
    %v1056 = vadd.f32 %v1043, %v1055
    %v1057 = vpop.f32.mrf.mxu0
    %1058 = vdwg.mxu0
    %1059 = vmatpush.bf16.msra.mxu0 0
    %1060 = vmatpush.bf16.msra.mxu0 0
    %1061 = vmatpush.bf16.msra.mxu0 0
    %1062 = vmatpush.bf16.msra.mxu0 0
    %1063 = vmatpush.bf16.msra.mxu0 0
    %1064 = vmatpush.bf16.msra.mxu0 %v1031
    %1065 = vmatpush.bf16.msra.mxu0 %v1005
    %1066 = vmatpush.bf16.msra.mxu0 %v1004
    %1067 = vmatmul.bf16.gmra.mxu0 %v1027
    %v1068 = vpop.f32.mrf.mxu0
    %v1069 = vadd.f32 %v1056, %v1068
    %v1070 = vpop.f32.mrf.mxu0
    %1071 = vdwg.mxu0
    %v1072 = vtanh.pop %v1069
    %vm1073 = vcmask 31744
    %1074 = vst.msk [vmem:[%s7] sm:$0xff] %vm1073, %v1072
    // Predicated region
    $region34: #{_actor_forward_jit.1} parent=1 // pred_check
      _
    $region35: #{_actor_forward_jit.1} parent=1 // pred_check_branch
      %1076 = sbr.rel (0) target = $region37
    $region36: #{_actor_forward_jit.1} parent=1 // pred_region
      _
    $region37: #{_actor_forward_jit.1} parent=1 // pred_fallthru
      _
    // Predicated region
    $region38: #{_actor_forward_jit.1} parent=1 // pred_check
      _
    $region39: #{_actor_forward_jit.1} parent=1 // pred_check_branch
      %1078 = sbr.rel (0) target = $region41
    $region40: #{_actor_forward_jit.1} parent=1 // pred_region
      _
    $region41: #{_actor_forward_jit.1} parent=1 // pred_fallthru
      _
    %1079 = vsyncpa [#allocation3], 1

// kernel: _actor_forward_jit.1
$region0: #{_actor_forward_jit.1}
  #allocation0 [shape = 'u32[]', space=smem, size = 0x4, offset = 0x4, fixed_abs, tag = 'smem constant byte address 0x4 - core index']
  #allocation1 [shape = 'u32[72,128]{1,0:T(1,128)}', space=vmem, size = 0x9000, scoped, tag = 'internal scratch']
  %s0 = inlined_call_operand.vmem [shape: f32[8,8], index: 0, kind: input, shape index: {}]
  %s1 = inlined_call_operand.vmem [shape: bf16[8,400], index: 1, kind: input, shape index: {}]
  %s2 = inlined_call_operand.vmem [shape: bf16[1,400], index: 2, kind: input, shape index: {}]
  %s3 = inlined_call_operand.hbm [shape: bf16[400,300], index: 3, kind: input, shape index: {}]
  %s4 = inlined_call_operand.vmem [shape: bf16[1,300], index: 4, kind: input, shape index: {}]
  %s5 = inlined_call_operand.vmem [shape: bf16[300,4], index: 5, kind: input, shape index: {}]
  %s6 = inlined_call_operand.vmem [shape: f32[1,4], index: 6, kind: input, shape index: {}]
  %s7 = inlined_call_operand.vmem [shape: f32[8,4], index: 7, kind: output, shape index: {}]
  %s8 = sld [smem:[#allocation0]]
  $region42: #{_actor_forward_jit.1} parent=0
    _
  %s10 = ssub.s32 1, %s8
  %s11 = scalar_select 0, %s10, %s8
  $region1: #{_actor_forward_jit.1} parent=0
    #allocation2 [shape = 'u8[307200]{0}', space=vmem, size = 0x4b000, scoped, tag = 'input window, operand 3, single buffered']
    #allocation3 [shape = 's32[1]{0}', space=sflag, size = 0x4, scoped, tag = 'scoped memory for _actor_forward_jit.1']
    %12 = vsyncpa [#allocation3], 0
    // Predicated region
    $region2: #{_actor_forward_jit.1} parent=1 // pred_check
      _
    $region3: #{_actor_forward_jit.1} parent=1 // pred_check_branch
      %14 = sbr.rel (0) target = $region5
    $region4: #{_actor_forward_jit.1} parent=1 // pred_region
      _
    $region5: #{_actor_forward_jit.1} parent=1 // pred_fallthru
      _
    // Predicated region
    $region6: #{_actor_forward_jit.1} parent=1 // pred_check
      _
    $region7: #{_actor_forward_jit.1} parent=1 // pred_check_branch
      %16 = sbr.rel (0) target = $region9
    $region8: #{_actor_forward_jit.1} parent=1 // pred_region
      _
    $region9: #{_actor_forward_jit.1} parent=1 // pred_fallthru
      _
    // Predicated region
    $region10: #{_actor_forward_jit.1} parent=1 // pred_check
      _
    $region11: #{_actor_forward_jit.1} parent=1 // pred_check_branch
      %18 = sbr.rel (0) target = $region13
    $region12: #{_actor_forward_jit.1} parent=1 // pred_region
      _
    $region13: #{_actor_forward_jit.1} parent=1 // pred_fallthru
      _
    // Predicated region
    $region14: #{_actor_forward_jit.1} parent=1 // pred_check
      _
    $region15: #{_actor_forward_jit.1} parent=1 // pred_check_branch
      %20 = sbr.rel (0) target = $region17
    $region16: #{_actor_forward_jit.1} parent=1 // pred_region
      %22 = vsyncadd [#allocation3], 0
      %s23 = sshll.u32 %s3, 4
      %s24 = int_to_ptr.hbm [resolvable:$true] %s23
      %s25 = sshll.u32 [#allocation2], 4
      %s26 = int_to_ptr.vmem [resolvable:$true] %s25
      %31 = dma.hbm_to_vmem [thread:$0]  %s24, 9600, %s26, [#allocation3], 192, 192, 12
    $region17: #{_actor_forward_jit.1} parent=1 // pred_fallthru
      _
    // Predicated region
    $region18: #{_actor_forward_jit.1} parent=1 // pred_check
      _
    $region19: #{_actor_forward_jit.1} parent=1 // pred_check_branch
      %33 = sbr.rel (0) target = $region21
    $region20: #{_actor_forward_jit.1} parent=1 // pred_region
      _
    $region21: #{_actor_forward_jit.1} parent=1 // pred_fallthru
      _
    // Predicated region
    $region22: #{_actor_forward_jit.1} parent=1 // pred_check
      _
    $region23: #{_actor_forward_jit.1} parent=1 // pred_check_branch
      %35 = sbr.rel (0) target = $region25
    $region24: #{_actor_forward_jit.1} parent=1 // pred_region
      _
    $region25: #{_actor_forward_jit.1} parent=1 // pred_fallthru
      _
    // Predicated region
    $region26: #{_actor_forward_jit.1} parent=1 // pred_check
      _
    $region27: #{_actor_forward_jit.1} parent=1 // pred_check_branch
      %37 = sbr.rel (0) target = $region29
    $region28: #{_actor_forward_jit.1} parent=1 // pred_region
      _
    $region29: #{_actor_forward_jit.1} parent=1 // pred_fallthru
      _
    // Predicated region
    $region30: #{_actor_forward_jit.1} parent=1 // pred_check
      _
    $region31: #{_actor_forward_jit.1} parent=1 // pred_check_branch
      %39 = sbr.rel (0) target = $region33
    $region32: #{_actor_forward_jit.1} parent=1 // pred_region
      %41 = dma.done [#allocation3], 9600
    $region33: #{_actor_forward_jit.1} parent=1 // pred_fallthru
      _
    %v43 = vld [vmem:[%s0] sm:$0xff]
    %v44 = vpack.c.bf16 %v43, %v43
    %v45 = vld [vmem:[%s1] sm:$0xff]
    %v46 = vld [vmem:[%s1 + $0x8] sm:$0xff]
    %v49 = vunpack.c.l.b16 %v45
    %v50 = vunpack.c.h.b16 %v45
    %v51 = vunpack.c.l.b16 %v46
    %v52 = vunpack.c.h.b16 %v46
    %v53 = vpack.c.b16 %v49, %v49
    %v54 = vpack.c.b16 %v50, %v50
    %v55 = vpack.c.b16 %v51, %v51
    %v56 = vpack.c.b16 %v52, %v52
    %vm57 = vcmask 64512
    %v59 = vsel %vm57, %v44, 0
    %vm61 = vcmask 1043456
    %v63 = vsel %vm61, %v53, 0
    %v66 = vsel %vm61, %v54, 0
    %v69 = vsel %vm61, %v55, 0
    %v72 = vsel %vm61, %v56, 0
    %74 = vmatpush.bf16.msra.mxu0 0
    %75 = vmatpush.bf16.msra.mxu0 0
    %76 = vmatpush.bf16.msra.mxu0 0
    %77 = vmatpush.bf16.msra.mxu0 0
    %78 = vmatpush.bf16.msra.mxu0 0
    %79 = vmatpush.bf16.msra.mxu0 0
    %80 = vmatpush.bf16.msra.mxu0 0
    %81 = vmatpush.bf16.msra.mxu0 %v63
    %82 = vmatmul.bf16.gmra.mxu0 %v59
    %v83 = vpop.f32.mrf.mxu0
    %v84 = vadd.f32 0.0, %v83
    %v85 = vpop.f32.mrf.mxu0
    %86 = vdwg.mxu0
    %87 = vmatpush.bf16.msra.mxu0 0
    %88 = vmatpush.bf16.msra.mxu0 0
    %89 = vmatpush.bf16.msra.mxu0 0
    %90 = vmatpush.bf16.msra.mxu0 0
    %91 = vmatpush.bf16.msra.mxu0 0
    %92 = vmatpush.bf16.msra.mxu0 0
    %93 = vmatpush.bf16.msra.mxu0 0
    %94 = vmatpush.bf16.msra.mxu0 %v66
    %95 = vmatmul.bf16.gmra.mxu0 %v59
    %v96 = vpop.f32.mrf.mxu0
    %v97 = vadd.f32 0.0, %v96
    %v98 = vpop.f32.mrf.mxu0
    %99 = vdwg.mxu0
    %100 = vmatpush.bf16.msra.mxu0 0
    %101 = vmatpush.bf16.msra.mxu0 0
    %102 = vmatpush.bf16.msra.mxu0 0
    %103 = vmatpush.bf16.msra.mxu0 0
    %104 = vmatpush.bf16.msra.mxu0 0
    %105 = vmatpush.bf16.msra.mxu0 0
    %106 = vmatpush.bf16.msra.mxu0 0
    %107 = vmatpush.bf16.msra.mxu0 %v69
    %108 = vmatmul.bf16.gmra.mxu0 %v59
    %v109 = vpop.f32.mrf.mxu0
    %v110 = vadd.f32 0.0, %v109
    %v111 = vpop.f32.mrf.mxu0
    %112 = vdwg.mxu0
    %113 = vmatpush.bf16.msra.mxu0 0
    %114 = vmatpush.bf16.msra.mxu0 0
    %115 = vmatpush.bf16.msra.mxu0 0
    %116 = vmatpush.bf16.msra.mxu0 0
    %117 = vmatpush.bf16.msra.mxu0 0
    %118 = vmatpush.bf16.msra.mxu0 0
    %119 = vmatpush.bf16.msra.mxu0 0
    %120 = vmatpush.bf16.msra.mxu0 %v72
    %121 = vmatmul.bf16.gmra.mxu0 %v59
    %v122 = vpop.f32.mrf.mxu0
    %v123 = vadd.f32 0.0, %v122
    %v124 = vpop.f32.mrf.mxu0
    %125 = vdwg.mxu0
    %v126 = vpack.c.bf16 %v97, %v84
    %v127 = vpack.c.bf16 %v123, %v110
    %v128 = vld [vmem:[%s2] sm:$0xf]
    %130 = vst [vmem:[#allocation1] ss:$9 sm:$0xff] %v128
    %v131 = vld [vmem:[#allocation1] sm:$0xff]
    %v132 = vld [vmem:[#allocation1 + $0x9] sm:$0xff]
    %v133 = vld [vmem:[#allocation1 + $0x12] sm:$0xff]
    %v134 = vld [vmem:[#allocation1 + $0x1b] sm:$0xff]
    %v135 = vpack.i.b16 %v131, %v131
    %v137 = vperm.slane %v135, 0
    %v138 = vpack.i.b16 %v132, %v132
    %v140 = vperm.slane %v138, 0
    %v141 = vpack.i.b16 %v133, %v133
    %v143 = vperm.slane %v141, 0
    %v144 = vpack.i.b16 %v134, %v134
    %v146 = vperm.slane %v144, 0
    %v147 = vunpack.c.l.bf16 %v126
    %v148 = vunpack.c.h.bf16 %v126
    %v149 = vunpack.c.l.bf16 %v127
    %v150 = vunpack.c.h.bf16 %v127
    %v151 = vunpack.c.l.bf16 %v137
    %v152 = vunpack.c.l.bf16 %v140
    %v153 = vunpack.c.l.bf16 %v143
    %v154 = vunpack.c.l.bf16 %v146
    %v155 = vadd.f32 %v147, %v151
    %v156 = vadd.f32 %v148, %v152
    %v157 = vadd.f32 %v149, %v153
    %v158 = vadd.f32 %v150, %v154
    %v159 = vpack.c.bf16 %v156, %v155
    %v160 = vpack.c.bf16 %v158, %v157
    %v161 = vunpack.c.l.bf16 %v159
    %v162 = vunpack.c.h.bf16 %v159
    %v163 = vunpack.c.l.bf16 %v160
    %v164 = vunpack.c.h.bf16 %v160
    %v165 = vmax.f32 %v161, 0.0
    %v166 = vmax.f32 %v162, 0.0
    %v167 = vmax.f32 %v163, 0.0
    %v168 = vmax.f32 %v164, 0.0
    %v169 = vpack.c.bf16 %v165, %v165
    %v170 = vpack.c.bf16 %v166, %v166
    %v171 = vpack.c.bf16 %v167, %v167
    %v172 = vpack.c.bf16 %v168, %v168
    %v173 = vld [vmem:[#allocation2] sm:$0xff]
    %v174 = vld [vmem:[#allocation2 + $0x8] sm:$0xf]
    %v175 = vld [vmem:[#allocation2 + $0xc] sm:$0xff]
    %v176 = vld [vmem:[#allocation2 + $0x14] sm:$0xf]
    %v177 = vld [vmem:[#allocation2 + $0x18] sm:$0xff]
    %v178 = vld [vmem:[#allocation2 + $0x20] sm:$0xf]
    %v179 = vld [vmem:[#allocation2 + $0x24] sm:$0xff]
    %v180 = vld [vmem:[#allocation2 + $0x2c] sm:$0xf]
    %v181 = vld [vmem:[#allocation2 + $0x30] sm:$0xff]
    %v182 = vld [vmem:[#allocation2 + $0x38] sm:$0xf]
    %v183 = vld [vmem:[#allocation2 + $0x3c] sm:$0xff]
    %v184 = vld [vmem:[#allocation2 + $0x44] sm:$0xf]
    %v185 = vld [vmem:[#allocation2 + $0x48] sm:$0xff]
    %v186 = vld [vmem:[#allocation2 + $0x50] sm:$0xf]
    %v187 = vld [vmem:[#allocation2 + $0x54] sm:$0xff]
    %v188 = vld [vmem:[#allocation2 + $0x5c] sm:$0xf]
    %v189 = vld [vmem:[#allocation2 + $0x60] sm:$0xff]
    %v190 = vld [vmem:[#allocation2 + $0x68] sm:$0xf]
    %v191 = vld [vmem:[#allocation2 + $0x6c] sm:$0xff]
    %v192 = vld [vmem:[#allocation2 + $0x74] sm:$0xf]
    %v193 = vld [vmem:[#allocation2 + $0x78] sm:$0xff]
    %v194 = vld [vmem:[#allocation2 + $0x80] sm:$0xf]
    %v195 = vld [vmem:[#allocation2 + $0x84] sm:$0xff]
    %v196 = vld [vmem:[#allocation2 + $0x8c] sm:$0xf]
    %v197 = vld [vmem:[#allocation2 + $0x90] sm:$0xff]
    %v198 = vld [vmem:[#allocation2 + $0x98] sm:$0xf]
    %v199 = vld [vmem:[#allocation2 + $0x9c] sm:$0xff]
    %v200 = vld [vmem:[#allocation2 + $0xa4] sm:$0xf]
    %v201 = vld [vmem:[#allocation2 + $0xa8] sm:$0xff]
    %v202 = vld [vmem:[#allocation2 + $0xb0] sm:$0xf]
    %v203 = vld [vmem:[#allocation2 + $0xb4] sm:$0xff]
    %v204 = vld [vmem:[#allocation2 + $0xbc] sm:$0xf]
    %v205 = vld [vmem:[#allocation2 + $0xc0] sm:$0xff]
    %v206 = vld [vmem:[#allocation2 + $0xc8] sm:$0xf]
    %v207 = vld [vmem:[#allocation2 + $0xcc] sm:$0xff]
    %v208 = vld [vmem:[#allocation2 + $0xd4] sm:$0xf]
    %v209 = vld [vmem:[#allocation2 + $0xd8] sm:$0xff]
    %v210 = vld [vmem:[#allocation2 + $0xe0] sm:$0xf]
    %v211 = vld [vmem:[#allocation2 + $0xe4] sm:$0xff]
    %v212 = vld [vmem:[#allocation2 + $0xec] sm:$0xf]
    %v213 = vld [vmem:[#allocation2 + $0xf0] sm:$0xff]
    %v214 = vld [vmem:[#allocation2 + $0xf8] sm:$0xf]
    %v215 = vld [vmem:[#allocation2 + $0xfc] sm:$0xff]
    %v216 = vld [vmem:[#allocation2 + $0x104] sm:$0xf]
    %v217 = vld [vmem:[#allocation2 + $0x108] sm:$0xff]
    %v218 = vld [vmem:[#allocation2 + $0x110] sm:$0xf]
    %v219 = vld [vmem:[#allocation2 + $0x114] sm:$0xff]
    %v220 = vld [vmem:[#allocation2 + $0x11c] sm:$0xf]
    %v221 = vld [vmem:[#allocation2 + $0x120] sm:$0xff]
    %v222 = vld [vmem:[#allocation2 + $0x128] sm:$0xf]
    %v223 = vld [vmem:[#allocation2 + $0x12c] sm:$0xff]
    %v224 = vld [vmem:[#allocation2 + $0x134] sm:$0xf]
    %v225 = vld [vmem:[#allocation2 + $0x138] sm:$0xff]
    %v226 = vld [vmem:[#allocation2 + $0x140] sm:$0xf]
    %v227 = vld [vmem:[#allocation2 + $0x144] sm:$0xff]
    %v228 = vld [vmem:[#allocation2 + $0x14c] sm:$0xf]
    %v229 = vld [vmem:[#allocation2 + $0x150] sm:$0xff]
    %v230 = vld [vmem:[#allocation2 + $0x158] sm:$0xf]
    %v231 = vld [vmem:[#allocation2 + $0x15c] sm:$0xff]
    %v232 = vld [vmem:[#allocation2 + $0x164] sm:$0xf]
    %v233 = vld [vmem:[#allocation2 + $0x168] sm:$0xff]
    %v234 = vld [vmem:[#allocation2 + $0x170] sm:$0xf]
    %v235 = vld [vmem:[#allocation2 + $0x174] sm:$0xff]
    %v236 = vld [vmem:[#allocation2 + $0x17c] sm:$0xf]
    %v237 = vld [vmem:[#allocation2 + $0x180] sm:$0xff]
    %v238 = vld [vmem:[#allocation2 + $0x188] sm:$0xf]
    %v239 = vld [vmem:[#allocation2 + $0x18c] sm:$0xff]
    %v240 = vld [vmem:[#allocation2 + $0x194] sm:$0xf]
    %v241 = vld [vmem:[#allocation2 + $0x198] sm:$0xff]
    %v242 = vld [vmem:[#allocation2 + $0x1a0] sm:$0xf]
    %v243 = vld [vmem:[#allocation2 + $0x1a4] sm:$0xff]
    %v244 = vld [vmem:[#allocation2 + $0x1ac] sm:$0xf]
    %v245 = vld [vmem:[#allocation2 + $0x1b0] sm:$0xff]
    %v246 = vld [vmem:[#allocation2 + $0x1b8] sm:$0xf]
    %v247 = vld [vmem:[#allocation2 + $0x1bc] sm:$0xff]
    %v248 = vld [vmem:[#allocation2 + $0x1c4] sm:$0xf]
    %v249 = vld [vmem:[#allocation2 + $0x1c8] sm:$0xff]
    %v250 = vld [vmem:[#allocation2 + $0x1d0] sm:$0xf]
    %v251 = vld [vmem:[#allocation2 + $0x1d4] sm:$0xff]
    %v252 = vld [vmem:[#allocation2 + $0x1dc] sm:$0xf]
    %v253 = vld [vmem:[#allocation2 + $0x1e0] sm:$0xff]
    %v254 = vld [vmem:[#allocation2 + $0x1e8] sm:$0xf]
    %v255 = vld [vmem:[#allocation2 + $0x1ec] sm:$0xff]
    %v256 = vld [vmem:[#allocation2 + $0x1f4] sm:$0xf]
    %v257 = vld [vmem:[#allocation2 + $0x1f8] sm:$0xff]
    %v258 = vld [vmem:[#allocation2 + $0x200] sm:$0xf]
    %v259 = vld [vmem:[#allocation2 + $0x204] sm:$0xff]
    %v260 = vld [vmem:[#allocation2 + $0x20c] sm:$0xf]
    %v261 = vld [vmem:[#allocation2 + $0x210] sm:$0xff]
    %v262 = vld [vmem:[#allocation2 + $0x218] sm:$0xf]
    %v263 = vld [vmem:[#allocation2 + $0x21c] sm:$0xff]
    %v264 = vld [vmem:[#allocation2 + $0x224] sm:$0xf]
    %v265 = vld [vmem:[#allocation2 + $0x228] sm:$0xff]
    %v266 = vld [vmem:[#allocation2 + $0x230] sm:$0xf]
    %v267 = vld [vmem:[#allocation2 + $0x234] sm:$0xff]
    %v268 = vld [vmem:[#allocation2 + $0x23c] sm:$0xf]
    %v269 = vld [vmem:[#allocation2 + $0x240] sm:$0xff]
    %v270 = vld [vmem:[#allocation2 + $0x248] sm:$0xf]
    %v271 = vld [vmem:[#allocation2 + $0x24c] sm:$0xff]
    %v272 = vld [vmem:[#allocation2 + $0x254] sm:$0xf]
    %v373 = vunpack.c.l.b16 %v173
    %v374 = vunpack.c.h.b16 %v173
    %v375 = vunpack.c.l.b16 %v174
    %v376 = vunpack.c.l.b16 %v175
    %v377 = vunpack.c.h.b16 %v175
    %v378 = vunpack.c.l.b16 %v176
    %v379 = vunpack.c.l.b16 %v177
    %v380 = vunpack.c.h.b16 %v177
    %v381 = vunpack.c.l.b16 %v178
    %v382 = vunpack.c.l.b16 %v179
    %v383 = vunpack.c.h.b16 %v179
    %v384 = vunpack.c.l.b16 %v180
    %v385 = vunpack.c.l.b16 %v181
    %v386 = vunpack.c.h.b16 %v181
    %v387 = vunpack.c.l.b16 %v182
    %v388 = vunpack.c.l.b16 %v183
    %v389 = vunpack.c.h.b16 %v183
    %v390 = vunpack.c.l.b16 %v184
    %v391 = vunpack.c.l.b16 %v185
    %v392 = vunpack.c.h.b16 %v185
    %v393 = vunpack.c.l.b16 %v186
    %v394 = vunpack.c.l.b16 %v187
    %v395 = vunpack.c.h.b16 %v187
    %v396 = vunpack.c.l.b16 %v188
    %v397 = vunpack.c.l.b16 %v189
    %v398 = vunpack.c.h.b16 %v189
    %v399 = vunpack.c.l.b16 %v190
    %v400 = vunpack.c.l.b16 %v191
    %v401 = vunpack.c.h.b16 %v191
    %v402 = vunpack.c.l.b16 %v192
    %v403 = vunpack.c.l.b16 %v193
    %v404 = vunpack.c.h.b16 %v193
    %v405 = vunpack.c.l.b16 %v194
    %v406 = vunpack.c.l.b16 %v195
    %v407 = vunpack.c.h.b16 %v195
    %v408 = vunpack.c.l.b16 %v196
    %v409 = vunpack.c.l.b16 %v197
    %v410 = vunpack.c.h.b16 %v197
    %v411 = vunpack.c.l.b16 %v198
    %v412 = vunpack.c.l.b16 %v199
    %v413 = vunpack.c.h.b16 %v199
    %v414 = vunpack.c.l.b16 %v200
    %v415 = vunpack.c.l.b16 %v201
    %v416 = vunpack.c.h.b16 %v201
    %v417 = vunpack.c.l.b16 %v202
    %v418 = vunpack.c.l.b16 %v203
    %v419 = vunpack.c.h.b16 %v203
    %v420 = vunpack.c.l.b16 %v204
    %v421 = vunpack.c.l.b16 %v205
    %v422 = vunpack.c.h.b16 %v205
    %v423 = vunpack.c.l.b16 %v206
    %v424 = vunpack.c.l.b16 %v207
    %v425 = vunpack.c.h.b16 %v207
    %v426 = vunpack.c.l.b16 %v208
    %v427 = vunpack.c.l.b16 %v209
    %v428 = vunpack.c.h.b16 %v209
    %v429 = vunpack.c.l.b16 %v210
    %v430 = vunpack.c.l.b16 %v211
    %v431 = vunpack.c.h.b16 %v211
    %v432 = vunpack.c.l.b16 %v212
    %v433 = vunpack.c.l.b16 %v213
    %v434 = vunpack.c.h.b16 %v213
    %v435 = vunpack.c.l.b16 %v214
    %v436 = vunpack.c.l.b16 %v215
    %v437 = vunpack.c.h.b16 %v215
    %v438 = vunpack.c.l.b16 %v216
    %v439 = vunpack.c.l.b16 %v217
    %v440 = vunpack.c.h.b16 %v217
    %v441 = vunpack.c.l.b16 %v218
    %v442 = vunpack.c.l.b16 %v219
    %v443 = vunpack.c.h.b16 %v219
    %v444 = vunpack.c.l.b16 %v220
    %v445 = vunpack.c.l.b16 %v221
    %v446 = vunpack.c.h.b16 %v221
    %v447 = vunpack.c.l.b16 %v222
    %v448 = vunpack.c.l.b16 %v223
    %v449 = vunpack.c.h.b16 %v223
    %v450 = vunpack.c.l.b16 %v224
    %v451 = vunpack.c.l.b16 %v225
    %v452 = vunpack.c.h.b16 %v225
    %v453 = vunpack.c.l.b16 %v226
    %v454 = vunpack.c.l.b16 %v227
    %v455 = vunpack.c.h.b16 %v227
    %v456 = vunpack.c.l.b16 %v228
    %v457 = vunpack.c.l.b16 %v229
    %v458 = vunpack.c.h.b16 %v229
    %v459 = vunpack.c.l.b16 %v230
    %v460 = vunpack.c.l.b16 %v231
    %v461 = vunpack.c.h.b16 %v231
    %v462 = vunpack.c.l.b16 %v232
    %v463 = vunpack.c.l.b16 %v233
    %v464 = vunpack.c.h.b16 %v233
    %v465 = vunpack.c.l.b16 %v234
    %v466 = vunpack.c.l.b16 %v235
    %v467 = vunpack.c.h.b16 %v235
    %v468 = vunpack.c.l.b16 %v236
    %v469 = vunpack.c.l.b16 %v237
    %v470 = vunpack.c.h.b16 %v237
    %v471 = vunpack.c.l.b16 %v238
    %v472 = vunpack.c.l.b16 %v239
    %v473 = vunpack.c.h.b16 %v239
    %v474 = vunpack.c.l.b16 %v240
    %v475 = vunpack.c.l.b16 %v241
    %v476 = vunpack.c.h.b16 %v241
    %v477 = vunpack.c.l.b16 %v242
    %v478 = vunpack.c.l.b16 %v243
    %v479 = vunpack.c.h.b16 %v243
    %v480 = vunpack.c.l.b16 %v244
    %v481 = vunpack.c.l.b16 %v245
    %v482 = vunpack.c.h.b16 %v245
    %v483 = vunpack.c.l.b16 %v246
    %v484 = vunpack.c.l.b16 %v247
    %v485 = vunpack.c.h.b16 %v247
    %v486 = vunpack.c.l.b16 %v248
    %v487 = vunpack.c.l.b16 %v249
    %v488 = vunpack.c.h.b16 %v249
    %v489 = vunpack.c.l.b16 %v250
    %v490 = vunpack.c.l.b16 %v251
    %v491 = vunpack.c.h.b16 %v251
    %v492 = vunpack.c.l.b16 %v252
    %v493 = vunpack.c.l.b16 %v253
    %v494 = vunpack.c.h.b16 %v253
    %v495 = vunpack.c.l.b16 %v254
    %v496 = vunpack.c.l.b16 %v255
    %v497 = vunpack.c.h.b16 %v255
    %v498 = vunpack.c.l.b16 %v256
    %v499 = vunpack.c.l.b16 %v257
    %v500 = vunpack.c.h.b16 %v257
    %v501 = vunpack.c.l.b16 %v258
    %v502 = vunpack.c.l.b16 %v259
    %v503 = vunpack.c.h.b16 %v259
    %v504 = vunpack.c.l.b16 %v260
    %v505 = vunpack.c.l.b16 %v261
    %v506 = vunpack.c.h.b16 %v261
    %v507 = vunpack.c.l.b16 %v262
    %v508 = vunpack.c.l.b16 %v263
    %v509 = vunpack.c.h.b16 %v263
    %v510 = vunpack.c.l.b16 %v264
    %v511 = vunpack.c.l.b16 %v265
    %v512 = vunpack.c.h.b16 %v265
    %v513 = vunpack.c.l.b16 %v266
    %v514 = vunpack.c.l.b16 %v267
    %v515 = vunpack.c.h.b16 %v267
    %v516 = vunpack.c.l.b16 %v268
    %v517 = vunpack.c.l.b16 %v269
    %v518 = vunpack.c.h.b16 %v269
    %v519 = vunpack.c.l.b16 %v270
    %v520 = vunpack.c.l.b16 %v271
    %v521 = vunpack.c.h.b16 %v271
    %v522 = vunpack.c.l.b16 %v272
    %v523 = vpack.c.b16 %v376, %v373
    %v524 = vpack.c.b16 %v377, %v374
    %v525 = vpack.c.b16 %v378, %v375
    %v526 = vpack.c.b16 %v382, %v379
    %v527 = vpack.c.b16 %v383, %v380
    %v528 = vpack.c.b16 %v384, %v381
    %v529 = vpack.c.b16 %v388, %v385
    %v530 = vpack.c.b16 %v389, %v386
    %v531 = vpack.c.b16 %v390, %v387
    %v532 = vpack.c.b16 %v394, %v391
    %v533 = vpack.c.b16 %v395, %v392
    %v534 = vpack.c.b16 %v396, %v393
    %v535 = vpack.c.b16 %v400, %v397
    %v536 = vpack.c.b16 %v401, %v398
    %v537 = vpack.c.b16 %v402, %v399
    %v538 = vpack.c.b16 %v406, %v403
    %v539 = vpack.c.b16 %v407, %v404
    %v540 = vpack.c.b16 %v408, %v405
    %v541 = vpack.c.b16 %v412, %v409
    %v542 = vpack.c.b16 %v413, %v410
    %v543 = vpack.c.b16 %v414, %v411
    %v544 = vpack.c.b16 %v418, %v415
    %v545 = vpack.c.b16 %v419, %v416
    %v546 = vpack.c.b16 %v420, %v417
    %v547 = vpack.c.b16 %v424, %v421
    %v548 = vpack.c.b16 %v425, %v422
    %v549 = vpack.c.b16 %v426, %v423
    %v550 = vpack.c.b16 %v430, %v427
    %v551 = vpack.c.b16 %v431, %v428
    %v552 = vpack.c.b16 %v432, %v429
    %v553 = vpack.c.b16 %v436, %v433
    %v554 = vpack.c.b16 %v437, %v434
    %v555 = vpack.c.b16 %v438, %v435
    %v556 = vpack.c.b16 %v442, %v439
    %v557 = vpack.c.b16 %v443, %v440
    %v558 = vpack.c.b16 %v444, %v441
    %v559 = vpack.c.b16 %v448, %v445
    %v560 = vpack.c.b16 %v449, %v446
    %v561 = vpack.c.b16 %v450, %v447
    %v562 = vpack.c.b16 %v454, %v451
    %v563 = vpack.c.b16 %v455, %v452
    %v564 = vpack.c.b16 %v456, %v453
    %v565 = vpack.c.b16 %v460, %v457
    %v566 = vpack.c.b16 %v461, %v458
    %v567 = vpack.c.b16 %v462, %v459
    %v568 = vpack.c.b16 %v466, %v463
    %v569 = vpack.c.b16 %v467, %v464
    %v570 = vpack.c.b16 %v468, %v465
    %v571 = vpack.c.b16 %v472, %v469
    %v572 = vpack.c.b16 %v473, %v470
    %v573 = vpack.c.b16 %v474, %v471
    %v574 = vpack.c.b16 %v478, %v475
    %v575 = vpack.c.b16 %v479, %v476
    %v576 = vpack.c.b16 %v480, %v477
    %v577 = vpack.c.b16 %v484, %v481
    %v578 = vpack.c.b16 %v485, %v482
    %v579 = vpack.c.b16 %v486, %v483
    %v580 = vpack.c.b16 %v490, %v487
    %v581 = vpack.c.b16 %v491, %v488
    %v582 = vpack.c.b16 %v492, %v489
    %v583 = vpack.c.b16 %v496, %v493
    %v584 = vpack.c.b16 %v497, %v494
    %v585 = vpack.c.b16 %v498, %v495
    %v586 = vpack.c.b16 %v502, %v499
    %v587 = vpack.c.b16 %v503, %v500
    %v588 = vpack.c.b16 %v504, %v501
    %v589 = vpack.c.b16 %v508, %v505
    %v590 = vpack.c.b16 %v509, %v506
    %v591 = vpack.c.b16 %v510, %v507
    %v592 = vpack.c.b16 %v514, %v511
    %v593 = vpack.c.b16 %v515, %v512
    %v594 = vpack.c.b16 %v516, %v513
    %v595 = vpack.c.b16 %v520, %v517
    %v596 = vpack.c.b16 %v521, %v518
    %v597 = vpack.c.b16 %v522, %v519
    %vm673 = vcmask 130048
    %v675 = vsel %vm673, %v172, 0
    %677 = vmatpush.bf16.msra.mxu0 %v544
    %678 = vmatpush.bf16.msra.mxu0 %v541
    %679 = vmatpush.bf16.msra.mxu0 %v538
    %680 = vmatpush.bf16.msra.mxu0 %v535
    %681 = vmatpush.bf16.msra.mxu0 %v532
    %682 = vmatpush.bf16.msra.mxu0 %v529
    %683 = vmatpush.bf16.msra.mxu0 %v526
    %684 = vmatpush.bf16.msra.mxu0 %v523
    %685 = vmatmul.bf16.gmra.mxu0 %v169
    %v686 = vpop.f32.mrf.mxu0
    %v687 = vadd.f32 0.0, %v686
    %v688 = vpop.f32.mrf.mxu0
    %689 = vdwg.mxu0
    %690 = vmatpush.bf16.msra.mxu0 %v568
    %691 = vmatpush.bf16.msra.mxu0 %v565
    %692 = vmatpush.bf16.msra.mxu0 %v562
    %693 = vmatpush.bf16.msra.mxu0 %v559
    %694 = vmatpush.bf16.msra.mxu0 %v556
    %695 = vmatpush.bf16.msra.mxu0 %v553
    %696 = vmatpush.bf16.msra.mxu0 %v550
    %697 = vmatpush.bf16.msra.mxu0 %v547
    %698 = vmatmul.bf16.gmra.mxu0 %v170
    %v699 = vpop.f32.mrf.mxu0
    %v700 = vadd.f32 %v687, %v699
    %v701 = vpop.f32.mrf.mxu0
    %702 = vdwg.mxu0
    %703 = vmatpush.bf16.msra.mxu0 %v592
    %704 = vmatpush.bf16.msra.mxu0 %v589
    %705 = vmatpush.bf16.msra.mxu0 %v586
    %706 = vmatpush.bf16.msra.mxu0 %v583
    %707 = vmatpush.bf16.msra.mxu0 %v580
    %708 = vmatpush.bf16.msra.mxu0 %v577
    %709 = vmatpush.bf16.msra.mxu0 %v574
    %710 = vmatpush.bf16.msra.mxu0 %v571
    %711 = vmatmul.bf16.gmra.mxu0 %v171
    %v712 = vpop.f32.mrf.mxu0
    %v713 = vadd.f32 %v700, %v712
    %v714 = vpop.f32.mrf.mxu0
    %715 = vdwg.mxu0
    %716 = vmatpush.bf16.msra.mxu0 0
    %717 = vmatpush.bf16.msra.mxu0 0
    %718 = vmatpush.bf16.msra.mxu0 0
    %719 = vmatpush.bf16.msra.mxu0 0
    %720 = vmatpush.bf16.msra.mxu0 0
    %721 = vmatpush.bf16.msra.mxu0 0
    %722 = vmatpush.bf16.msra.mxu0 0
    %723 = vmatpush.bf16.msra.mxu0 %v595
    %724 = vmatmul.bf16.gmra.mxu0 %v675
    %v725 = vpop.f32.mrf.mxu0
    %v726 = vadd.f32 %v713, %v725
    %v727 = vpop.f32.mrf.mxu0
    %728 = vdwg.mxu0
    %729 = vmatpush.bf16.msra.mxu0 %v545
    %730 = vmatpush.bf16.msra.mxu0 %v542
    %731 = vmatpush.bf16.msra.mxu0 %v539
    %732 = vmatpush.bf16.msra.mxu0 %v536
    %733 = vmatpush.bf16.msra.mxu0 %v533
    %734 = vmatpush.bf16.msra.mxu0 %v530
    %735 = vmatpush.bf16.msra.mxu0 %v527
    %736 = vmatpush.bf16.msra.mxu0 %v524
    %737 = vmatmul.bf16.gmra.mxu0 %v169
    %v738 = vpop.f32.mrf.mxu0
    %v739 = vadd.f32 0.0, %v738
    %v740 = vpop.f32.mrf.mxu0
    %741 = vdwg.mxu0
    %742 = vmatpush.bf16.msra.mxu0 %v569
    %743 = vmatpush.bf16.msra.mxu0 %v566
    %744 = vmatpush.bf16.msra.mxu0 %v563
    %745 = vmatpush.bf16.msra.mxu0 %v560
    %746 = vmatpush.bf16.msra.mxu0 %v557
    %747 = vmatpush.bf16.msra.mxu0 %v554
    %748 = vmatpush.bf16.msra.mxu0 %v551
    %749 = vmatpush.bf16.msra.mxu0 %v548
    %750 = vmatmul.bf16.gmra.mxu0 %v170
    %v751 = vpop.f32.mrf.mxu0
    %v752 = vadd.f32 %v739, %v751
    %v753 = vpop.f32.mrf.mxu0
    %754 = vdwg.mxu0
    %755 = vmatpush.bf16.msra.mxu0 %v593
    %756 = vmatpush.bf16.msra.mxu0 %v590
    %757 = vmatpush.bf16.msra.mxu0 %v587
    %758 = vmatpush.bf16.msra.mxu0 %v584
    %759 = vmatpush.bf16.msra.mxu0 %v581
    %760 = vmatpush.bf16.msra.mxu0 %v578
    %761 = vmatpush.bf16.msra.mxu0 %v575
    %762 = vmatpush.bf16.msra.mxu0 %v572
    %763 = vmatmul.bf16.gmra.mxu0 %v171
    %v764 = vpop.f32.mrf.mxu0
    %v765 = vadd.f32 %v752, %v764
    %v766 = vpop.f32.mrf.mxu0
    %767 = vdwg.mxu0
    %768 = vmatpush.bf16.msra.mxu0 0
    %769 = vmatpush.bf16.msra.mxu0 0
    %770 = vmatpush.bf16.msra.mxu0 0
    %771 = vmatpush.bf16.msra.mxu0 0
    %772 = vmatpush.bf16.msra.mxu0 0
    %773 = vmatpush.bf16.msra.mxu0 0
    %774 = vmatpush.bf16.msra.mxu0 0
    %775 = vmatpush.bf16.msra.mxu0 %v596
    %776 = vmatmul.bf16.gmra.mxu0 %v675
    %v777 = vpop.f32.mrf.mxu0
    %v778 = vadd.f32 %v765, %v777
    %v779 = vpop.f32.mrf.mxu0
    %780 = vdwg.mxu0
    %781 = vmatpush.bf16.msra.mxu0 %v546
    %782 = vmatpush.bf16.msra.mxu0 %v543
    %783 = vmatpush.bf16.msra.mxu0 %v540
    %784 = vmatpush.bf16.msra.mxu0 %v537
    %785 = vmatpush.bf16.msra.mxu0 %v534
    %786 = vmatpush.bf16.msra.mxu0 %v531
    %787 = vmatpush.bf16.msra.mxu0 %v528
    %788 = vmatpush.bf16.msra.mxu0 %v525
    %789 = vmatmul.bf16.gmra.mxu0 %v169
    %v790 = vpop.f32.mrf.mxu0
    %v791 = vadd.f32 0.0, %v790
    %v792 = vpop.f32.mrf.mxu0
    %793 = vdwg.mxu0
    %794 = vmatpush.bf16.msra.mxu0 %v570
    %795 = vmatpush.bf16.msra.mxu0 %v567
    %796 = vmatpush.bf16.msra.mxu0 %v564
    %797 = vmatpush.bf16.msra.mxu0 %v561
    %798 = vmatpush.bf16.msra.mxu0 %v558
    %799 = vmatpush.bf16.msra.mxu0 %v555
    %800 = vmatpush.bf16.msra.mxu0 %v552
    %801 = vmatpush.bf16.msra.mxu0 %v549
    %802 = vmatmul.bf16.gmra.mxu0 %v170
    %v803 = vpop.f32.mrf.mxu0
    %v804 = vadd.f32 %v791, %v803
    %v805 = vpop.f32.mrf.mxu0
    %806 = vdwg.mxu0
    %807 = vmatpush.bf16.msra.mxu0 %v594
    %808 = vmatpush.bf16.msra.mxu0 %v591
    %809 = vmatpush.bf16.msra.mxu0 %v588
    %810 = vmatpush.bf16.msra.mxu0 %v585
    %811 = vmatpush.bf16.msra.mxu0 %v582
    %812 = vmatpush.bf16.msra.mxu0 %v579
    %813 = vmatpush.bf16.msra.mxu0 %v576
    %814 = vmatpush.bf16.msra.mxu0 %v573
    %815 = vmatmul.bf16.gmra.mxu0 %v171
    %v816 = vpop.f32.mrf.mxu0
    %v817 = vadd.f32 %v804, %v816
    %v818 = vpop.f32.mrf.mxu0
    %819 = vdwg.mxu0
    %820 = vmatpush.bf16.msra.mxu0 0
    %821 = vmatpush.bf16.msra.mxu0 0
    %822 = vmatpush.bf16.msra.mxu0 0
    %823 = vmatpush.bf16.msra.mxu0 0
    %824 = vmatpush.bf16.msra.mxu0 0
    %825 = vmatpush.bf16.msra.mxu0 0
    %826 = vmatpush.bf16.msra.mxu0 0
    %827 = vmatpush.bf16.msra.mxu0 %v597
    %828 = vmatmul.bf16.gmra.mxu0 %v675
    %v829 = vpop.f32.mrf.mxu0
    %v830 = vadd.f32 %v817, %v829
    %v831 = vpop.f32.mrf.mxu0
    %832 = vdwg.mxu0
    %v833 = vpack.c.bf16 %v778, %v726
    %v834 = vpack.c.bf16 %v830, %v830
    %v835 = vld [vmem:[%s4] sm:$0x7]
    %837 = vst [vmem:[#allocation1] ss:$9 sm:$0xff] %v835
    %v838 = vld [vmem:[#allocation1] sm:$0xff]
    %v839 = vld [vmem:[#allocation1 + $0x9] sm:$0xff]
    %v840 = vld [vmem:[#allocation1 + $0x12] sm:$0xff]
    %v841 = vpack.i.b16 %v838, %v838
    %v843 = vperm.slane %v841, 0
    %v844 = vpack.i.b16 %v839, %v839
    %v846 = vperm.slane %v844, 0
    %v847 = vpack.i.b16 %v840, %v840
    %v849 = vperm.slane %v847, 0
    %v850 = vunpack.c.l.bf16 %v833
    %v851 = vunpack.c.h.bf16 %v833
    %v852 = vunpack.c.l.bf16 %v834
    %v853 = vunpack.c.l.bf16 %v843
    %v854 = vunpack.c.l.bf16 %v846
    %v855 = vunpack.c.l.bf16 %v849
    %v856 = vadd.f32 %v850, %v853
    %v857 = vadd.f32 %v851, %v854
    %v858 = vadd.f32 %v852, %v855
    %v859 = vpack.c.bf16 %v857, %v856
    %v860 = vpack.c.bf16 %v858, %v858
    %v861 = vunpack.c.l.bf16 %v859
    %v862 = vunpack.c.h.bf16 %v859
    %v863 = vunpack.c.l.bf16 %v860
    %v864 = vmax.f32 %v861, 0.0
    %v865 = vmax.f32 %v862, 0.0
    %v866 = vmax.f32 %v863, 0.0
    %v867 = vpack.c.bf16 %v864, %v864
    %v868 = vpack.c.bf16 %v865, %v865
    %v869 = vpack.c.bf16 %v866, %v866
    %v870 = vld [vmem:[%s5] sm:$0xf]
    %v871 = vld [vmem:[%s5 + $0x4] sm:$0xf]
    %v872 = vld [vmem:[%s5 + $0x8] sm:$0xf]
    %v873 = vld [vmem:[%s5 + $0xc] sm:$0xf]
    %v874 = vld [vmem:[%s5 + $0x10] sm:$0xf]
    %v875 = vld [vmem:[%s5 + $0x14] sm:$0xf]
    %v876 = vld [vmem:[%s5 + $0x18] sm:$0xf]
    %v877 = vld [vmem:[%s5 + $0x1c] sm:$0xf]
    %v878 = vld [vmem:[%s5 + $0x20] sm:$0xf]
    %v879 = vld [vmem:[%s5 + $0x24] sm:$0xf]
    %v880 = vld [vmem:[%s5 + $0x28] sm:$0xf]
    %v881 = vld [vmem:[%s5 + $0x2c] sm:$0xf]
    %v882 = vld [vmem:[%s5 + $0x30] sm:$0xf]
    %v883 = vld [vmem:[%s5 + $0x34] sm:$0xf]
    %v884 = vld [vmem:[%s5 + $0x38] sm:$0xf]
    %v885 = vld [vmem:[%s5 + $0x3c] sm:$0xf]
    %v886 = vld [vmem:[%s5 + $0x40] sm:$0xf]
    %v887 = vld [vmem:[%s5 + $0x44] sm:$0xf]
    %v888 = vld [vmem:[%s5 + $0x48] sm:$0xf]
    %v889 = vld [vmem:[%s5 + $0x4c] sm:$0xf]
    %v890 = vld [vmem:[%s5 + $0x50] sm:$0xf]
    %v891 = vld [vmem:[%s5 + $0x54] sm:$0xf]
    %v892 = vld [vmem:[%s5 + $0x58] sm:$0xf]
    %v893 = vld [vmem:[%s5 + $0x5c] sm:$0xf]
    %v894 = vld [vmem:[%s5 + $0x60] sm:$0xf]
    %v895 = vld [vmem:[%s5 + $0x64] sm:$0xf]
    %v896 = vld [vmem:[%s5 + $0x68] sm:$0xf]
    %v897 = vld [vmem:[%s5 + $0x6c] sm:$0xf]
    %v898 = vld [vmem:[%s5 + $0x70] sm:$0xf]
    %v899 = vld [vmem:[%s5 + $0x74] sm:$0xf]
    %v900 = vld [vmem:[%s5 + $0x78] sm:$0xf]
    %v901 = vld [vmem:[%s5 + $0x7c] sm:$0xf]
    %v902 = vld [vmem:[%s5 + $0x80] sm:$0xf]
    %v903 = vld [vmem:[%s5 + $0x84] sm:$0xf]
    %v904 = vld [vmem:[%s5 + $0x88] sm:$0xf]
    %v905 = vld [vmem:[%s5 + $0x8c] sm:$0xf]
    %v906 = vld [vmem:[%s5 + $0x90] sm:$0xf]
    %v907 = vld [vmem:[%s5 + $0x94] sm:$0x3]
    %v908 = vld [vmem:[%s6] sm:$0x1]
    %v910 = vperm.slane %v908, 0
    %v950 = vunpack.c.l.b16 %v870
    %v951 = vunpack.c.l.b16 %v871
    %v952 = vunpack.c.l.b16 %v872
    %v953 = vunpack.c.l.b16 %v873
    %v954 = vunpack.c.l.b16 %v874
    %v955 = vunpack.c.l.b16 %v875
    %v956 = vunpack.c.l.b16 %v876
    %v957 = vunpack.c.l.b16 %v877
    %v958 = vunpack.c.l.b16 %v878
    %v959 = vunpack.c.l.b16 %v879
    %v960 = vunpack.c.l.b16 %v880
    %v961 = vunpack.c.l.b16 %v881
    %v962 = vunpack.c.l.b16 %v882
    %v963 = vunpack.c.l.b16 %v883
    %v964 = vunpack.c.l.b16 %v884
    %v965 = vunpack.c.l.b16 %v885
    %v966 = vunpack.c.l.b16 %v886
    %v967 = vunpack.c.l.b16 %v887
    %v968 = vunpack.c.l.b16 %v888
    %v969 = vunpack.c.l.b16 %v889
    %v970 = vunpack.c.l.b16 %v890
    %v971 = vunpack.c.l.b16 %v891
    %v972 = vunpack.c.l.b16 %v892
    %v973 = vunpack.c.l.b16 %v893
    %v974 = vunpack.c.l.b16 %v894
    %v975 = vunpack.c.l.b16 %v895
    %v976 = vunpack.c.l.b16 %v896
    %v977 = vunpack.c.l.b16 %v897
    %v978 = vunpack.c.l.b16 %v898
    %v979 = vunpack.c.l.b16 %v899
    %v980 = vunpack.c.l.b16 %v900
    %v981 = vunpack.c.l.b16 %v901
    %v982 = vunpack.c.l.b16 %v902
    %v983 = vunpack.c.l.b16 %v903
    %v984 = vunpack.c.l.b16 %v904
    %v985 = vunpack.c.l.b16 %v905
    %v986 = vunpack.c.l.b16 %v906
    %v987 = vunpack.c.l.b16 %v907
    %v988 = vpack.c.b16 %v951, %v950
    %v989 = vpack.c.b16 %v953, %v952
    %v990 = vpack.c.b16 %v955, %v954
    %v991 = vpack.c.b16 %v957, %v956
    %v992 = vpack.c.b16 %v959, %v958
    %v993 = vpack.c.b16 %v961, %v960
    %v994 = vpack.c.b16 %v963, %v962
    %v995 = vpack.c.b16 %v965, %v964
    %v996 = vpack.c.b16 %v967, %v966
    %v997 = vpack.c.b16 %v969, %v968
    %v998 = vpack.c.b16 %v971, %v970
    %v999 = vpack.c.b16 %v973, %v972
    %v1000 = vpack.c.b16 %v975, %v974
    %v1001 = vpack.c.b16 %v977, %v976
    %v1002 = vpack.c.b16 %v979, %v978
    %v1003 = vpack.c.b16 %v981, %v980
    %v1004 = vpack.c.b16 %v983, %v982
    %v1005 = vpack.c.b16 %v985, %v984
    %v1006 = vpack.c.b16 %v987, %v986
    %vm1025 = vcmask 359424
    %v1027 = vsel %vm1025, %v869, 0
    %vm1029 = vcmask 1045504
    %v1031 = vsel %vm1029, %v1006, 0
    %1033 = vmatpush.bf16.msra.mxu0 %v995
    %1034 = vmatpush.bf16.msra.mxu0 %v994
    %1035 = vmatpush.bf16.msra.mxu0 %v993
    %1036 = vmatpush.bf16.msra.mxu0 %v992
    %1037 = vmatpush.bf16.msra.mxu0 %v991
    %1038 = vmatpush.bf16.msra.mxu0 %v990
    %1039 = vmatpush.bf16.msra.mxu0 %v989
    %1040 = vmatpush.bf16.msra.mxu0 %v988
    %1041 = vmatmul.bf16.gmra.mxu0 %v867
    %v1042 = vpop.f32.mrf.mxu0
    %v1043 = vadd.f32 %v910, %v1042
    %v1044 = vpop.f32.mrf.mxu0
    %1045 = vdwg.mxu0
    %1046 = vmatpush.bf16.msra.mxu0 %v1003
    %1047 = vmatpush.bf16.msra.mxu0 %v1002
    %1048 = vmatpush.bf16.msra.mxu0 %v1001
    %1049 = vmatpush.bf16.msra.mxu0 %v1000
    %1050 = vmatpush.bf16.msra.mxu0 %v999
    %1051 = vmatpush.bf16.msra.mxu0 %v998
    %1052 = vmatpush.bf16.msra.mxu0 %v997
    %1053 = vmatpush.bf16.msra.mxu0 %v996
    %1054 = vmatmul.bf16.gmra.mxu0 %v868
    %v1055 = vpop.f32.mrf.mxu0
    %v1056 = vadd.f32 %v1043, %v1055
    %v1057 = vpop.f32.mrf.mxu0
    %1058 = vdwg.mxu0
    %1059 = vmatpush.bf16.msra.mxu0 0
    %1060 = vmatpush.bf16.msra.mxu0 0
    %1061 = vmatpush.bf16.msra.mxu0 0
    %1062 = vmatpush.bf16.msra.mxu0 0
    %1063 = vmatpush.bf16.msra.mxu0 0
    %1064 = vmatpush.bf16.msra.mxu0 %v1031
    %1065 = vmatpush.bf16.msra.mxu0 %v1005
    %1066 = vmatpush.bf16.msra.mxu0 %v1004
    %1067 = vmatmul.bf16.gmra.mxu0 %v1027
    %v1068 = vpop.f32.mrf.mxu0
    %v1069 = vadd.f32 %v1056, %v1068
    %v1070 = vpop.f32.mrf.mxu0
    %1071 = vdwg.mxu0
    %v1072 = vtanh.pop %v1069
    %vm1073 = vcmask 31744
    %1074 = vst.msk [vmem:[%s7] sm:$0xff] %vm1073, %v1072
    // Predicated region
    $region34: #{_actor_forward_jit.1} parent=1 // pred_check
      _
    $region35: #{_actor_forward_jit.1} parent=1 // pred_check_branch
      %1076 = sbr.rel (0) target = $region37
    $region36: #{_actor_forward_jit.1} parent=1 // pred_region
      _
    $region37: #{_actor_forward_jit.1} parent=1 // pred_fallthru
      _
    // Predicated region
    $region38: #{_actor_forward_jit.1} parent=1 // pred_check
      _
    $region39: #{_actor_forward_jit.1} parent=1 // pred_check_branch
      %1078 = sbr.rel (0) target = $region41
    $region40: #{_actor_forward_jit.1} parent=1 // pred_region
      _
    $region41: #{_actor_forward_jit.1} parent=1 // pred_fallthru
      _
    %1079 = vsyncpa [#allocation3], 1

</llo_original>
